<compile_context>
chip_gen: v6e
topology: v6e:2x2x1
jax: 0.10.0
libtpu: 0.0.40
codegen_flags: <defaults>
</compile_context>

<pallas_src>
import jax
import jax.numpy as jnp
import numpy as np
from jax.experimental import pallas as pl
from jax.experimental.pallas import tpu as pltpu

# ---- small, module-consistent config (hidden = num_heads * head_dim) -------
B = 2            # batch
S = 8            # seqlen
NH = 4           # attention heads
HD = 32          # head dim
H = NH * HD      # hidden size = 128
I = 256          # intermediate size
L = 3            # number of decoder layers (GemmaModel stacks layers + norm)
R = B * S        # rows after folding batch into sublanes = 16
EPS = 1e-6
SCALING = HD ** -0.5
GELU_C = float(np.sqrt(2.0 / np.pi))


def _rmsnorm(x, w):
    ms = jnp.mean(x * x, axis=-1, keepdims=True)
    return x * jax.lax.rsqrt(ms + EPS) * w


def gemma_model_kernel(x_ref, wqkv_ref, wo_ref, wgu_ref, wd_ref, ln_ref,
                       rope_ref, mask_ref, wfin_ref, o_ref, h_ref, attn_ref):
    l = pl.program_id(0)

    # Load the input hidden state once; carry it across layers in VMEM.
    @pl.when(l == 0)
    def _():
        h_ref[...] = x_ref[...]

    x = h_ref[...]                              # (R, H)
    ln = ln_ref[0]                              # (2, H): row0 = ln1, row1 = ln2
    ln1 = ln[0:1, :]
    ln2 = ln[1:2, :]
    rope = rope_ref[...]                        # (2R, H): cos rows then sin rows
    cos = rope[0:R, :]
    sin = rope[R:2 * R, :]                      # sign-interleaved sin
    mask = mask_ref[...]                        # (R, R) block-diag causal mask

    lane = jax.lax.broadcasted_iota(jnp.int32, (R, H), 1)
    is_even = (lane % 2) == 0

    # ---- input RMSNorm + fused QKV projection -------------------------------
    xn = _rmsnorm(x, ln1)
    qkv = jnp.dot(xn, wqkv_ref[0], preferred_element_type=jnp.float32)  # (R,3H)
    q_all = qkv[:, 0 * H:1 * H]
    k_all = qkv[:, 1 * H:2 * H]
    v_all = qkv[:, 2 * H:3 * H]

    # ---- RoPE: lane-local pair swap via XLU rolls (no matmul) ---------------
    def apply_rope(z):
        from_right = pltpu.roll(z, shift=H - 1, axis=1)   # z[:, lane+1]
        from_left = pltpu.roll(z, shift=1, axis=1)        # z[:, lane-1]
        swapped = jnp.where(is_even, from_right, from_left)
        return z * cos + swapped * sin

    q_all = apply_rope(q_all) * SCALING
    k_all = apply_rope(k_all)
    k_t = k_all.T                                          # one transpose (H, R)

    # ---- attention: per-head softmax, single o_proj matmul ------------------
    for h in range(NH):
        qh = q_all[:, h * HD:(h + 1) * HD]                 # (R, HD)
        kh_t = k_t[h * HD:(h + 1) * HD, :]                 # (HD, R) sublane slice
        vh = v_all[:, h * HD:(h + 1) * HD]
        scores = jnp.dot(qh, kh_t, preferred_element_type=jnp.float32) + mask
        scores = scores - jnp.max(scores, axis=-1, keepdims=True)
        p = jnp.exp(scores)
        p = p * pl.reciprocal(jnp.sum(p, axis=-1, keepdims=True), approx=True)
        attn_ref[:, h * HD:(h + 1) * HD] = jnp.dot(
            p, vh, preferred_element_type=jnp.float32)
    attn_o = jnp.dot(attn_ref[...], wo_ref[0],
                     preferred_element_type=jnp.float32)   # (R, H), K=128

    # ---- residual + post-attn RMSNorm + fused gate|up MLP -------------------
    h1 = x + attn_o
    hn = _rmsnorm(h1, ln2)
    gu = jnp.dot(hn, wgu_ref[0], preferred_element_type=jnp.float32)   # (R, 2I)
    gate = gu[:, :I]
    up = gu[:, I:]
    gate = 0.5 * gate * (1.0 + jnp.tanh(
        GELU_C * (gate + 0.044715 * gate * gate * gate)))
    down = jnp.dot(gate * up, wd_ref[0], preferred_element_type=jnp.float32)

    h_new = h1 + down
    h_ref[...] = h_new

    # ---- final model-level RMSNorm, written once at the last layer ----------
    @pl.when(l == pl.num_programs(0) - 1)
    def _():
        o_ref[...] = _rmsnorm(h_new, wfin_ref[...])


def gemma_model(x, wqkv_t, wo_t, wgu_t, wd_t, ln_w, w_final,
                freqs_real, freqs_imag, mask):
    # RoPE tables folded to (R, H): duplicate cos per pair, sign-interleave sin,
    # tile over heads (lanes) and batch (sublanes), pack into one slab.
    cos_head = jnp.repeat(freqs_real, 2, axis=-1)                       # (S, HD)
    sin_head = jnp.stack([-freqs_imag, freqs_imag], axis=-1).reshape(S, HD)
    cos_full = jnp.tile(cos_head, (B, NH))                              # (R, H)
    sin_full = jnp.tile(sin_head, (B, NH))
    rope = jnp.concatenate([cos_full, sin_full], axis=0)                # (2R, H)

    # Batch folded into rows -> block-diagonal causal mask (R, R).
    blk = jnp.arange(R) // S
    same = blk[:, None] == blk[None, :]
    mask_big = jnp.where(same, jnp.tile(mask, (B, B)), jnp.float32(-1e9))

    x_flat = x.reshape(R, H)
    w_final_2d = w_final.reshape(1, H)

    out_flat = pl.pallas_call(
        gemma_model_kernel,
        out_shape=jax.ShapeDtypeStruct((R, H), jnp.float32),
        grid_spec=pltpu.PrefetchScalarGridSpec(
            num_scalar_prefetch=0,
            grid=(L,),
            in_specs=[
                pl.BlockSpec((R, H), lambda l: (0, 0)),            # x (resident)
                pl.BlockSpec((1, H, 3 * H), lambda l: (l, 0, 0)),  # wqkv (stream)
                pl.BlockSpec((1, H, H), lambda l: (l, 0, 0)),      # wo
                pl.BlockSpec((1, H, 2 * I), lambda l: (l, 0, 0)),  # w_gate|up
                pl.BlockSpec((1, I, H), lambda l: (l, 0, 0)),      # w_down
                pl.BlockSpec((1, 2, H), lambda l: (l, 0, 0)),      # ln1|ln2
                pl.BlockSpec((2 * R, H), lambda l: (0, 0)),        # cos|sin slab
                pl.BlockSpec((R, R), lambda l: (0, 0)),            # mask
                pl.BlockSpec((1, H), lambda l: (0, 0)),            # final norm w
            ],
            out_specs=pl.BlockSpec((R, H), lambda l: (0, 0)),
            scratch_shapes=[
                pltpu.VMEM((R, H), jnp.float32),   # hidden-state carry
                pltpu.VMEM((R, H), jnp.float32),   # per-head attention staging
            ],
        ),
        compiler_params=pltpu.CompilerParams(
            dimension_semantics=("arbitrary",)),
    )(x_flat, wqkv_t, wo_t, wgu_t, wd_t, ln_w, rope, mask_big, w_final_2d)
    return out_flat.reshape(B, S, H)


# ---------------------- pure-JAX reference (mirrors PyTorch) -----------------
def reference(x, wqkv_t, wo_t, wgu_t, wd_t, ln_w, w_final, fr, fi, mask):
    def rmsnorm(z, w):
        return z * jax.lax.rsqrt(jnp.mean(z * z, -1, keepdims=True) + EPS) * w

    def rope(z):
        z_ = z.reshape(B, S, NH, HD // 2, 2)
        real, imag = z_[..., 0], z_[..., 1]
        fr_ = fr[None, :, None, :]
        fi_ = fi[None, :, None, :]
        rr = real * fr_ - imag * fi_
        ri = real * fi_ + imag * fr_
        return jnp.stack([rr, ri], -1).reshape(B, S, NH, HD)

    h = x
    for l in range(L):
        xn = rmsnorm(h, ln_w[l, 0])
        qkv = (xn @ wqkv_t[l]).reshape(B, S, 3, NH, HD)
        q, k, v = qkv[:, :, 0], qkv[:, :, 1], qkv[:, :, 2]
        q = jnp.transpose(rope(q), (0, 2, 1, 3)) * SCALING
        k = jnp.transpose(rope(k), (0, 2, 1, 3))
        v = jnp.transpose(v, (0, 2, 1, 3))
        scores = q @ jnp.swapaxes(k, -1, -2) + mask[None, None]
        probs = jax.nn.softmax(scores, axis=-1)
        ao = jnp.transpose(probs @ v, (0, 2, 1, 3)).reshape(B, S, H)
        h1 = h + ao @ wo_t[l]
        hn = rmsnorm(h1, ln_w[l, 1])
        gu = hn @ wgu_t[l]
        g, u = gu[..., :I], gu[..., I:]
        g = 0.5 * g * (1.0 + jnp.tanh(GELU_C * (g + 0.044715 * g ** 3)))
        h = h1 + (g * u) @ wd_t[l]
    return rmsnorm(h, w_final)


if __name__ == "__main__":
    key = jax.random.PRNGKey(0)
    ks = jax.random.split(key, 8)

    x = jax.random.normal(ks[0], (B, S, H), jnp.float32)
    # nn.Linear weights (out, in) pre-transposed to (in, out); gate|up fused.
    wqkv_t = 0.02 * jax.random.normal(ks[1], (L, H, 3 * H), jnp.float32)
    wo_t = 0.02 * jax.random.normal(ks[2], (L, H, H), jnp.float32)
    wgu_t = 0.02 * jax.random.normal(ks[3], (L, H, 2 * I), jnp.float32)
    wd_t = 0.02 * jax.random.normal(ks[4], (L, I, H), jnp.float32)
    # RMSNorm weights (PyTorch init = ones; perturbed to exercise the multiply)
    ln_w = 1.0 + 0.1 * jax.random.normal(ks[5], (L, 2, H), jnp.float32)
    w_final = 1.0 + 0.1 * jax.random.normal(ks[6], (H,), jnp.float32)

    # rotary tables (freqs_cis) for positions 0..S-1
    inv_freq = 1.0 / (10000.0 ** (np.arange(0, HD, 2, dtype=np.float32) / HD))
    angles = np.arange(S, dtype=np.float32)[:, None] * inv_freq[None, :]
    freqs_real = jnp.asarray(np.cos(angles))   # (S, HD//2)
    freqs_imag = jnp.asarray(np.sin(angles))   # (S, HD//2)

    # causal additive mask (as passed to GemmaModel.forward)
    mask = jnp.asarray(np.triu(np.full((S, S), -1e9, dtype=np.float32), k=1))

    out = gemma_model(x, wqkv_t, wo_t, wgu_t, wd_t, ln_w, w_final,
                      freqs_real, freqs_imag, mask)
    out = jax.block_until_ready(out)

    ref = reference(x, wqkv_t, wo_t, wgu_t, wd_t, ln_w, w_final,
                    freqs_real, freqs_imag, mask)
    np.testing.assert_allclose(np.asarray(out), np.asarray(ref),
                               rtol=1e-3, atol=1e-3)
    print("KERNEL_OK")
</pallas_src>

<mosaic_0001>
module attributes {stable_mosaic.version = 11 : i64} {
  func.func @gemma_model_kernel(%arg0: i32, %arg1: memref<16x128xf32, #tpu.memory_space<vmem>>, %arg2: memref<1x128x384xf32, #tpu.memory_space<vmem>>, %arg3: memref<1x128x128xf32, #tpu.memory_space<vmem>>, %arg4: memref<1x128x512xf32, #tpu.memory_space<vmem>>, %arg5: memref<1x256x128xf32, #tpu.memory_space<vmem>>, %arg6: memref<1x2x128xf32, #tpu.memory_space<vmem>>, %arg7: memref<32x128xf32, #tpu.memory_space<vmem>>, %arg8: memref<16x16xf32, #tpu.memory_space<vmem>>, %arg9: memref<1x128xf32, #tpu.memory_space<vmem>>, %arg10: memref<16x128xf32, #tpu.memory_space<vmem>>, %arg11: memref<16x128xf32, #tpu.memory_space<vmem>>, %arg12: memref<16x128xf32, #tpu.memory_space<vmem>>) attributes {dimension_semantics = [#tpu.dimension_semantics<arbitrary>], iteration_bounds = array<i64: 3>, scalar_prefetch = 0 : i64, scratch_operands = 2 : i64, tpu.core_type = #tpu.core_type<tc>, window_params = [{pipeline_mode = #tpu.pipeline_mode<synchronous>, transform_indices = @transform_0, window_bounds = array<i64: 16, 128>}, {transform_indices = @transform_1, window_bounds = array<i64: 1, 128, 384>}, {transform_indices = @transform_2, window_bounds = array<i64: 1, 128, 128>}, {transform_indices = @transform_3, window_bounds = array<i64: 1, 128, 512>}, {transform_indices = @transform_4, window_bounds = array<i64: 1, 256, 128>}, {transform_indices = @transform_5, window_bounds = array<i64: 1, 2, 128>}, {pipeline_mode = #tpu.pipeline_mode<synchronous>, transform_indices = @transform_6, window_bounds = array<i64: 32, 128>}, {pipeline_mode = #tpu.pipeline_mode<synchronous>, transform_indices = @transform_7, window_bounds = array<i64: 16, 16>}, {pipeline_mode = #tpu.pipeline_mode<synchronous>, transform_indices = @transform_8, window_bounds = array<i64: 1, 128>}, {pipeline_mode = #tpu.pipeline_mode<synchronous>, transform_indices = @transform_9, window_bounds = array<i64: 16, 128>}]} {
    %c0_i32 = arith.constant 0 : i32
    %0 = arith.cmpi eq, %arg0, %c0_i32 : i32
    %1 = arith.extui %0 : i1 to i32
    %c0_i32_0 = arith.constant 0 : i32
    %2 = arith.cmpi ne, %1, %c0_i32_0 : i32
    scf.if %2 {
      %c0_70 = arith.constant 0 : index
      %c0_71 = arith.constant 0 : index
      %176 = vector.load %arg1[%c0_70, %c0_71] : memref<16x128xf32, #tpu.memory_space<vmem>>, vector<16x128xf32>
      %c0_72 = arith.constant 0 : index
      %c0_73 = arith.constant 0 : index
      %177 = vector.load %arg11[%c0_72, %c0_73] : memref<16x128xf32, #tpu.memory_space<vmem>>, vector<16x128xf32>
      tpu.vector_store %arg11[%c0_72, %c0_73], %176 {strides = array<i32>} : memref<16x128xf32, #tpu.memory_space<vmem>>, vector<16x128xf32>,
    } else {
    }
    %c0 = arith.constant 0 : index
    %c0_1 = arith.constant 0 : index
    %3 = vector.load %arg11[%c0, %c0_1] : memref<16x128xf32, #tpu.memory_space<vmem>>, vector<16x128xf32>
    %c0_2 = arith.constant 0 : index
    %c0_3 = arith.constant 0 : index
    %c0_4 = arith.constant 0 : index
    %4 = vector.load %arg6[%c0_2, %c0_3, %c0_4] : memref<1x2x128xf32, #tpu.memory_space<vmem>>, vector<1x2x128xf32>
    %5 = vector.shape_cast %4 : vector<1x2x128xf32> to vector<2x128xf32>
    %6 = vector.extract_strided_slice %5 {offsets = [0, 0], sizes = [1, 128], strides = [1, 1]} : vector<2x128xf32> to vector<1x128xf32>
    %7 = vector.extract_strided_slice %5 {offsets = [1, 0], sizes = [1, 128], strides = [1, 1]} : vector<2x128xf32> to vector<1x128xf32>
    %c0_5 = arith.constant 0 : index
    %c0_6 = arith.constant 0 : index
    %8 = vector.load %arg7[%c0_5, %c0_6] : memref<32x128xf32, #tpu.memory_space<vmem>>, vector<32x128xf32>
    %9 = vector.extract_strided_slice %8 {offsets = [0, 0], sizes = [16, 128], strides = [1, 1]} : vector<32x128xf32> to vector<16x128xf32>
    %10 = vector.extract_strided_slice %8 {offsets = [16, 0], sizes = [16, 128], strides = [1, 1]} : vector<32x128xf32> to vector<16x128xf32>
    %c0_7 = arith.constant 0 : index
    %c0_8 = arith.constant 0 : index
    %11 = vector.load %arg8[%c0_7, %c0_8] : memref<16x16xf32, #tpu.memory_space<vmem>>, vector<16x16xf32>
    %12 = tpu.iota {dimensions = array<i32: 1>} : vector<16x128xi32>
    %c2_i32 = arith.constant 2 : i32
    %c0_i32_9 = arith.constant 0 : i32
    %13 = arith.cmpi eq, %c2_i32, %c0_i32_9 : i32
    %c1_i32 = arith.constant 1 : i32
    %14 = arith.select %13, %c1_i32, %c2_i32 : i32
    %15 = vector.broadcast %14 : i32 to vector<16x128xi32>
    %16 = arith.remsi %12, %15 : vector<16x128xi32>
    %c0_i32_10 = arith.constant 0 : i32
    %17 = vector.broadcast %c0_i32_10 : i32 to vector<16x128xi32>
    %18 = arith.cmpi ne, %16, %17 : vector<16x128xi32>
    %c0_i32_11 = arith.constant 0 : i32
    %19 = vector.broadcast %c0_i32_11 : i32 to vector<16x128xi32>
    %20 = arith.cmpi slt, %16, %19 : vector<16x128xi32>
    %c0_i32_12 = arith.constant 0 : i32
    %21 = arith.cmpi slt, %14, %c0_i32_12 : i32
    %22 = vector.broadcast %21 : i1 to vector<16x128xi1>
    %23 = vector.broadcast %22 : vector<16x128xi1> to vector<16x128xi1>
    %24 = arith.xori %20, %23 : vector<16x128xi1>
    %25 = arith.andi %24, %18 : vector<16x128xi1>
    %26 = vector.broadcast %14 : i32 to vector<16x128xi32>
    %27 = arith.addi %16, %26 : vector<16x128xi32>
    %28 = arith.select %25, %27, %16 : vector<16x128xi1>, vector<16x128xi32>
    %c0_i32_13 = arith.constant 0 : i32
    %29 = vector.broadcast %c0_i32_13 : i32 to vector<16x128xi32>
    %30 = arith.cmpi eq, %28, %29 : vector<16x128xi32>
    %31 = arith.mulf %3, %3 : vector<16x128xf32>
    %cst = arith.constant dense<0.000000e+00> : vector<16xf32>
    %32 = vector.multi_reduction <add>, %31, %cst [1] : vector<16x128xf32> to vector<16xf32>
    %33 = vector.shape_cast %32 : vector<16xf32> to vector<16x1xf32>
    %cst_14 = arith.constant 1.280000e+02 : f32
    %34 = vector.broadcast %cst_14 : f32 to vector<16x1xf32>
    %35 = arith.divf %33, %34 : vector<16x1xf32>
    %cst_15 = arith.constant 9.99999997E-7 : f32
    %36 = vector.broadcast %cst_15 : f32 to vector<16x1xf32>
    %37 = arith.addf %35, %36 : vector<16x1xf32>
    %38 = math.rsqrt %37 : vector<16x1xf32>
    %39 = vector.broadcast %38 : vector<16x1xf32> to vector<16x128xf32>
    %40 = arith.mulf %3, %39 : vector<16x128xf32>
    %41 = vector.broadcast %6 : vector<1x128xf32> to vector<16x128xf32>
    %42 = arith.mulf %40, %41 : vector<16x128xf32>
    %c0_16 = arith.constant 0 : index
    %c0_17 = arith.constant 0 : index
    %c0_18 = arith.constant 0 : index
    %43 = vector.load %arg2[%c0_16, %c0_17, %c0_18] : memref<1x128x384xf32, #tpu.memory_space<vmem>>, vector<1x128x384xf32>
    %44 = vector.shape_cast %43 : vector<1x128x384xf32> to vector<128x384xf32>
    %cst_19 = arith.constant dense<0.000000e+00> : vector<16x384xf32>
    %45 = tpu.matmul %42, %44, %cst_19 {dimension_numbers = #tpu.dot_dimension_numbers<[1], [0], [0], [1], [0, 0, 1, 1], [], []>} : vector<16x128xf32>, vector<128x384xf32>, vector<16x384xf32> -> vector<16x384xf32>
    %46 = vector.extract_strided_slice %45 {offsets = [0, 0], sizes = [16, 128], strides = [1, 1]} : vector<16x384xf32> to vector<16x128xf32>
    %47 = vector.extract_strided_slice %45 {offsets = [0, 128], sizes = [16, 128], strides = [1, 1]} : vector<16x384xf32> to vector<16x128xf32>
    %48 = vector.extract_strided_slice %45 {offsets = [0, 256], sizes = [16, 128], strides = [1, 1]} : vector<16x384xf32> to vector<16x128xf32>
    %c127_i32 = arith.constant 127 : i32
    %49 = tpu.dynamic_rotate %46 by %c127_i32 dim 1 : vector<16x128xf32>, i32 -> vector<16x128xf32>
    %c1_i32_20 = arith.constant 1 : i32
    %50 = tpu.dynamic_rotate %46 by %c1_i32_20 dim 1 : vector<16x128xf32>, i32 -> vector<16x128xf32>
    %51 = arith.select %30, %49, %50 : vector<16x128xi1>, vector<16x128xf32>
    %52 = arith.mulf %46, %9 : vector<16x128xf32>
    %53 = arith.mulf %51, %10 : vector<16x128xf32>
    %54 = arith.addf %52, %53 : vector<16x128xf32>
    %cst_21 = arith.constant 0.176776692 : f32
    %55 = vector.broadcast %cst_21 : f32 to vector<16x128xf32>
    %56 = arith.mulf %54, %55 : vector<16x128xf32>
    %c127_i32_22 = arith.constant 127 : i32
    %57 = tpu.dynamic_rotate %47 by %c127_i32_22 dim 1 : vector<16x128xf32>, i32 -> vector<16x128xf32>
    %c1_i32_23 = arith.constant 1 : i32
    %58 = tpu.dynamic_rotate %47 by %c1_i32_23 dim 1 : vector<16x128xf32>, i32 -> vector<16x128xf32>
    %59 = arith.select %30, %57, %58 : vector<16x128xi1>, vector<16x128xf32>
    %60 = arith.mulf %47, %9 : vector<16x128xf32>
    %61 = arith.mulf %59, %10 : vector<16x128xf32>
    %62 = arith.addf %60, %61 : vector<16x128xf32>
    %63 = tpu.transpose %62, [1, 0] : vector<16x128xf32> -> vector<128x16xf32>
    %64 = vector.extract_strided_slice %56 {offsets = [0, 0], sizes = [16, 32], strides = [1, 1]} : vector<16x128xf32> to vector<16x32xf32>
    %65 = vector.extract_strided_slice %63 {offsets = [0, 0], sizes = [32, 16], strides = [1, 1]} : vector<128x16xf32> to vector<32x16xf32>
    %66 = vector.extract_strided_slice %48 {offsets = [0, 0], sizes = [16, 32], strides = [1, 1]} : vector<16x128xf32> to vector<16x32xf32>
    %cst_24 = arith.constant dense<0.000000e+00> : vector<16x16xf32>
    %67 = tpu.matmul %64, %65, %cst_24 {dimension_numbers = #tpu.dot_dimension_numbers<[1], [0], [0], [1], [0, 0, 1, 1], [], []>} : vector<16x32xf32>, vector<32x16xf32>, vector<16x16xf32> -> vector<16x16xf32>
    %68 = arith.addf %67, %11 : vector<16x16xf32>
    %cst_25 = arith.constant dense<0xFF800000> : vector<16xf32>
    %69 = vector.multi_reduction <maximumf>, %68, %cst_25 [1] : vector<16x16xf32> to vector<16xf32>
    %70 = vector.shape_cast %69 : vector<16xf32> to vector<16x1xf32>
    %71 = vector.broadcast %70 : vector<16x1xf32> to vector<16x16xf32>
    %72 = arith.subf %68, %71 : vector<16x16xf32>
    %73 = math.exp %72 : vector<16x16xf32>
    %cst_26 = arith.constant dense<0.000000e+00> : vector<16xf32>
    %74 = vector.multi_reduction <add>, %73, %cst_26 [1] : vector<16x16xf32> to vector<16xf32>
    %75 = vector.shape_cast %74 : vector<16xf32> to vector<16x1xf32>
    %76 = tpu.reciprocal %75 {approx = true} : vector<16x1xf32> -> vector<16x1xf32>
    %77 = vector.broadcast %76 : vector<16x1xf32> to vector<16x16xf32>
    %78 = arith.mulf %73, %77 : vector<16x16xf32>
    %cst_27 = arith.constant dense<0.000000e+00> : vector<16x32xf32>
    %79 = tpu.matmul %78, %66, %cst_27 {dimension_numbers = #tpu.dot_dimension_numbers<[1], [0], [0], [1], [0, 0, 1, 1], [], []>} : vector<16x16xf32>, vector<16x32xf32>, vector<16x32xf32> -> vector<16x32xf32>
    %c0_28 = arith.constant 0 : index
    %c0_29 = arith.constant 0 : index
    %80 = vector.load %arg12[%c0_28, %c0_29] : memref<16x128xf32, #tpu.memory_space<vmem>>, vector<16x32xf32>
    tpu.vector_store %arg12[%c0_28, %c0_29], %79 {strides = array<i32>} : memref<16x128xf32, #tpu.memory_space<vmem>>, vector<16x32xf32>,
    %81 = vector.extract_strided_slice %56 {offsets = [0, 32], sizes = [16, 32], strides = [1, 1]} : vector<16x128xf32> to vector<16x32xf32>
    %82 = vector.extract_strided_slice %63 {offsets = [32, 0], sizes = [32, 16], strides = [1, 1]} : vector<128x16xf32> to vector<32x16xf32>
    %83 = vector.extract_strided_slice %48 {offsets = [0, 32], sizes = [16, 32], strides = [1, 1]} : vector<16x128xf32> to vector<16x32xf32>
    %cst_30 = arith.constant dense<0.000000e+00> : vector<16x16xf32>
    %84 = tpu.matmul %81, %82, %cst_30 {dimension_numbers = #tpu.dot_dimension_numbers<[1], [0], [0], [1], [0, 0, 1, 1], [], []>} : vector<16x32xf32>, vector<32x16xf32>, vector<16x16xf32> -> vector<16x16xf32>
    %85 = arith.addf %84, %11 : vector<16x16xf32>
    %cst_31 = arith.constant dense<0xFF800000> : vector<16xf32>
    %86 = vector.multi_reduction <maximumf>, %85, %cst_31 [1] : vector<16x16xf32> to vector<16xf32>
    %87 = vector.shape_cast %86 : vector<16xf32> to vector<16x1xf32>
    %88 = vector.broadcast %87 : vector<16x1xf32> to vector<16x16xf32>
    %89 = arith.subf %85, %88 : vector<16x16xf32>
    %90 = math.exp %89 : vector<16x16xf32>
    %cst_32 = arith.constant dense<0.000000e+00> : vector<16xf32>
    %91 = vector.multi_reduction <add>, %90, %cst_32 [1] : vector<16x16xf32> to vector<16xf32>
    %92 = vector.shape_cast %91 : vector<16xf32> to vector<16x1xf32>
    %93 = tpu.reciprocal %92 {approx = true} : vector<16x1xf32> -> vector<16x1xf32>
    %94 = vector.broadcast %93 : vector<16x1xf32> to vector<16x16xf32>
    %95 = arith.mulf %90, %94 : vector<16x16xf32>
    %cst_33 = arith.constant dense<0.000000e+00> : vector<16x32xf32>
    %96 = tpu.matmul %95, %83, %cst_33 {dimension_numbers = #tpu.dot_dimension_numbers<[1], [0], [0], [1], [0, 0, 1, 1], [], []>} : vector<16x16xf32>, vector<16x32xf32>, vector<16x32xf32> -> vector<16x32xf32>
    %c0_34 = arith.constant 0 : index
    %c32 = arith.constant 32 : index
    %97 = vector.load %arg12[%c0_34, %c32] : memref<16x128xf32, #tpu.memory_space<vmem>>, vector<16x32xf32>
    tpu.vector_store %arg12[%c0_34, %c32], %96 {strides = array<i32>} : memref<16x128xf32, #tpu.memory_space<vmem>>, vector<16x32xf32>,
    %98 = vector.extract_strided_slice %56 {offsets = [0, 64], sizes = [16, 32], strides = [1, 1]} : vector<16x128xf32> to vector<16x32xf32>
    %99 = vector.extract_strided_slice %63 {offsets = [64, 0], sizes = [32, 16], strides = [1, 1]} : vector<128x16xf32> to vector<32x16xf32>
    %100 = vector.extract_strided_slice %48 {offsets = [0, 64], sizes = [16, 32], strides = [1, 1]} : vector<16x128xf32> to vector<16x32xf32>
    %cst_35 = arith.constant dense<0.000000e+00> : vector<16x16xf32>
    %101 = tpu.matmul %98, %99, %cst_35 {dimension_numbers = #tpu.dot_dimension_numbers<[1], [0], [0], [1], [0, 0, 1, 1], [], []>} : vector<16x32xf32>, vector<32x16xf32>, vector<16x16xf32> -> vector<16x16xf32>
    %102 = arith.addf %101, %11 : vector<16x16xf32>
    %cst_36 = arith.constant dense<0xFF800000> : vector<16xf32>
    %103 = vector.multi_reduction <maximumf>, %102, %cst_36 [1] : vector<16x16xf32> to vector<16xf32>
    %104 = vector.shape_cast %103 : vector<16xf32> to vector<16x1xf32>
    %105 = vector.broadcast %104 : vector<16x1xf32> to vector<16x16xf32>
    %106 = arith.subf %102, %105 : vector<16x16xf32>
    %107 = math.exp %106 : vector<16x16xf32>
    %cst_37 = arith.constant dense<0.000000e+00> : vector<16xf32>
    %108 = vector.multi_reduction <add>, %107, %cst_37 [1] : vector<16x16xf32> to vector<16xf32>
    %109 = vector.shape_cast %108 : vector<16xf32> to vector<16x1xf32>
    %110 = tpu.reciprocal %109 {approx = true} : vector<16x1xf32> -> vector<16x1xf32>
    %111 = vector.broadcast %110 : vector<16x1xf32> to vector<16x16xf32>
    %112 = arith.mulf %107, %111 : vector<16x16xf32>
    %cst_38 = arith.constant dense<0.000000e+00> : vector<16x32xf32>
    %113 = tpu.matmul %112, %100, %cst_38 {dimension_numbers = #tpu.dot_dimension_numbers<[1], [0], [0], [1], [0, 0, 1, 1], [], []>} : vector<16x16xf32>, vector<16x32xf32>, vector<16x32xf32> -> vector<16x32xf32>
    %c0_39 = arith.constant 0 : index
    %c64 = arith.constant 64 : index
    %114 = vector.load %arg12[%c0_39, %c64] : memref<16x128xf32, #tpu.memory_space<vmem>>, vector<16x32xf32>
    tpu.vector_store %arg12[%c0_39, %c64], %113 {strides = array<i32>} : memref<16x128xf32, #tpu.memory_space<vmem>>, vector<16x32xf32>,
    %115 = vector.extract_strided_slice %56 {offsets = [0, 96], sizes = [16, 32], strides = [1, 1]} : vector<16x128xf32> to vector<16x32xf32>
    %116 = vector.extract_strided_slice %63 {offsets = [96, 0], sizes = [32, 16], strides = [1, 1]} : vector<128x16xf32> to vector<32x16xf32>
    %117 = vector.extract_strided_slice %48 {offsets = [0, 96], sizes = [16, 32], strides = [1, 1]} : vector<16x128xf32> to vector<16x32xf32>
    %cst_40 = arith.constant dense<0.000000e+00> : vector<16x16xf32>
    %118 = tpu.matmul %115, %116, %cst_40 {dimension_numbers = #tpu.dot_dimension_numbers<[1], [0], [0], [1], [0, 0, 1, 1], [], []>} : vector<16x32xf32>, vector<32x16xf32>, vector<16x16xf32> -> vector<16x16xf32>
    %119 = arith.addf %118, %11 : vector<16x16xf32>
    %cst_41 = arith.constant dense<0xFF800000> : vector<16xf32>
    %120 = vector.multi_reduction <maximumf>, %119, %cst_41 [1] : vector<16x16xf32> to vector<16xf32>
    %121 = vector.shape_cast %120 : vector<16xf32> to vector<16x1xf32>
    %122 = vector.broadcast %121 : vector<16x1xf32> to vector<16x16xf32>
    %123 = arith.subf %119, %122 : vector<16x16xf32>
    %124 = math.exp %123 : vector<16x16xf32>
    %cst_42 = arith.constant dense<0.000000e+00> : vector<16xf32>
    %125 = vector.multi_reduction <add>, %124, %cst_42 [1] : vector<16x16xf32> to vector<16xf32>
    %126 = vector.shape_cast %125 : vector<16xf32> to vector<16x1xf32>
    %127 = tpu.reciprocal %126 {approx = true} : vector<16x1xf32> -> vector<16x1xf32>
    %128 = vector.broadcast %127 : vector<16x1xf32> to vector<16x16xf32>
    %129 = arith.mulf %124, %128 : vector<16x16xf32>
    %cst_43 = arith.constant dense<0.000000e+00> : vector<16x32xf32>
    %130 = tpu.matmul %129, %117, %cst_43 {dimension_numbers = #tpu.dot_dimension_numbers<[1], [0], [0], [1], [0, 0, 1, 1], [], []>} : vector<16x16xf32>, vector<16x32xf32>, vector<16x32xf32> -> vector<16x32xf32>
    %c0_44 = arith.constant 0 : index
    %c96 = arith.constant 96 : index
    %131 = vector.load %arg12[%c0_44, %c96] : memref<16x128xf32, #tpu.memory_space<vmem>>, vector<16x32xf32>
    tpu.vector_store %arg12[%c0_44, %c96], %130 {strides = array<i32>} : memref<16x128xf32, #tpu.memory_space<vmem>>, vector<16x32xf32>,
    %c0_45 = arith.constant 0 : index
    %c0_46 = arith.constant 0 : index
    %132 = vector.load %arg12[%c0_45, %c0_46] : memref<16x128xf32, #tpu.memory_space<vmem>>, vector<16x128xf32>
    %c0_47 = arith.constant 0 : index
    %c0_48 = arith.constant 0 : index
    %c0_49 = arith.constant 0 : index
    %133 = vector.load %arg3[%c0_47, %c0_48, %c0_49] : memref<1x128x128xf32, #tpu.memory_space<vmem>>, vector<1x128x128xf32>
    %134 = vector.shape_cast %133 : vector<1x128x128xf32> to vector<128x128xf32>
    %cst_50 = arith.constant dense<0.000000e+00> : vector<16x128xf32>
    %135 = tpu.matmul %132, %134, %cst_50 {dimension_numbers = #tpu.dot_dimension_numbers<[1], [0], [0], [1], [0, 0, 1, 1], [], []>} : vector<16x128xf32>, vector<128x128xf32>, vector<16x128xf32> -> vector<16x128xf32>
    %136 = arith.addf %3, %135 : vector<16x128xf32>
    %137 = arith.mulf %136, %136 : vector<16x128xf32>
    %cst_51 = arith.constant dense<0.000000e+00> : vector<16xf32>
    %138 = vector.multi_reduction <add>, %137, %cst_51 [1] : vector<16x128xf32> to vector<16xf32>
    %139 = vector.shape_cast %138 : vector<16xf32> to vector<16x1xf32>
    %cst_52 = arith.constant 1.280000e+02 : f32
    %140 = vector.broadcast %cst_52 : f32 to vector<16x1xf32>
    %141 = arith.divf %139, %140 : vector<16x1xf32>
    %cst_53 = arith.constant 9.99999997E-7 : f32
    %142 = vector.broadcast %cst_53 : f32 to vector<16x1xf32>
    %143 = arith.addf %141, %142 : vector<16x1xf32>
    %144 = math.rsqrt %143 : vector<16x1xf32>
    %145 = vector.broadcast %144 : vector<16x1xf32> to vector<16x128xf32>
    %146 = arith.mulf %136, %145 : vector<16x128xf32>
    %147 = vector.broadcast %7 : vector<1x128xf32> to vector<16x128xf32>
    %148 = arith.mulf %146, %147 : vector<16x128xf32>
    %c0_54 = arith.constant 0 : index
    %c0_55 = arith.constant 0 : index
    %c0_56 = arith.constant 0 : index
    %149 = vector.load %arg4[%c0_54, %c0_55, %c0_56] : memref<1x128x512xf32, #tpu.memory_space<vmem>>, vector<1x128x512xf32>
    %150 = vector.shape_cast %149 : vector<1x128x512xf32> to vector<128x512xf32>
    %cst_57 = arith.constant dense<0.000000e+00> : vector<16x512xf32>
    %151 = tpu.matmul %148, %150, %cst_57 {dimension_numbers = #tpu.dot_dimension_numbers<[1], [0], [0], [1], [0, 0, 1, 1], [], []>} : vector<16x128xf32>, vector<128x512xf32>, vector<16x512xf32> -> vector<16x512xf32>
    %152 = vector.extract_strided_slice %151 {offsets = [0, 0], sizes = [16, 256], strides = [1, 1]} : vector<16x512xf32> to vector<16x256xf32>
    %153 = vector.extract_strided_slice %151 {offsets = [0, 256], sizes = [16, 256], strides = [1, 1]} : vector<16x512xf32> to vector<16x256xf32>
    %cst_58 = arith.constant 5.000000e-01 : f32
    %154 = vector.broadcast %cst_58 : f32 to vector<16x256xf32>
    %155 = arith.mulf %154, %152 : vector<16x256xf32>
    %cst_59 = arith.constant 4.471500e-02 : f32
    %156 = vector.broadcast %cst_59 : f32 to vector<16x256xf32>
    %157 = arith.mulf %156, %152 : vector<16x256xf32>
    %158 = arith.mulf %157, %152 : vector<16x256xf32>
    %159 = arith.mulf %158, %152 : vector<16x256xf32>
    %160 = arith.addf %152, %159 : vector<16x256xf32>
    %cst_60 = arith.constant 0.797884583 : f32
    %161 = vector.broadcast %cst_60 : f32 to vector<16x256xf32>
    %162 = arith.mulf %161, %160 : vector<16x256xf32>
    %163 = math.tanh %162 : vector<16x256xf32>
    %cst_61 = arith.constant 1.000000e+00 : f32
    %164 = vector.broadcast %cst_61 : f32 to vector<16x256xf32>
    %165 = arith.addf %164, %163 : vector<16x256xf32>
    %166 = arith.mulf %155, %165 : vector<16x256xf32>
    %167 = arith.mulf %166, %153 : vector<16x256xf32>
    %c0_62 = arith.constant 0 : index
    %c0_63 = arith.constant 0 : index
    %c0_64 = arith.constant 0 : index
    %168 = vector.load %arg5[%c0_62, %c0_63, %c0_64] : memref<1x256x128xf32, #tpu.memory_space<vmem>>, vector<1x256x128xf32>
    %169 = vector.shape_cast %168 : vector<1x256x128xf32> to vector<256x128xf32>
    %cst_65 = arith.constant dense<0.000000e+00> : vector<16x128xf32>
    %170 = tpu.matmul %167, %169, %cst_65 {dimension_numbers = #tpu.dot_dimension_numbers<[1], [0], [0], [1], [0, 0, 1, 1], [], []>} : vector<16x256xf32>, vector<256x128xf32>, vector<16x128xf32> -> vector<16x128xf32>
    %171 = arith.addf %136, %170 : vector<16x128xf32>
    %c0_66 = arith.constant 0 : index
    %c0_67 = arith.constant 0 : index
    %172 = vector.load %arg11[%c0_66, %c0_67] : memref<16x128xf32, #tpu.memory_space<vmem>>, vector<16x128xf32>
    tpu.vector_store %arg11[%c0_66, %c0_67], %171 {strides = array<i32>} : memref<16x128xf32, #tpu.memory_space<vmem>>, vector<16x128xf32>,
    %c2_i32_68 = arith.constant 2 : i32
    %173 = arith.cmpi eq, %arg0, %c2_i32_68 : i32
    %174 = arith.extui %173 : i1 to i32
    %c0_i32_69 = arith.constant 0 : i32
    %175 = arith.cmpi ne, %174, %c0_i32_69 : i32
    scf.if %175 {
      %c0_70 = arith.constant 0 : index
      %c0_71 = arith.constant 0 : index
      %176 = vector.load %arg9[%c0_70, %c0_71] : memref<1x128xf32, #tpu.memory_space<vmem>>, vector<1x128xf32>
      %177 = arith.mulf %171, %171 : vector<16x128xf32>
      %cst_72 = arith.constant dense<0.000000e+00> : vector<16xf32>
      %178 = vector.multi_reduction <add>, %177, %cst_72 [1] : vector<16x128xf32> to vector<16xf32>
      %179 = vector.shape_cast %178 : vector<16xf32> to vector<16x1xf32>
      %cst_73 = arith.constant 1.280000e+02 : f32
      %180 = vector.broadcast %cst_73 : f32 to vector<16x1xf32>
      %181 = arith.divf %179, %180 : vector<16x1xf32>
      %cst_74 = arith.constant 9.99999997E-7 : f32
      %182 = vector.broadcast %cst_74 : f32 to vector<16x1xf32>
      %183 = arith.addf %181, %182 : vector<16x1xf32>
      %184 = math.rsqrt %183 : vector<16x1xf32>
      %185 = vector.broadcast %184 : vector<16x1xf32> to vector<16x128xf32>
      %186 = arith.mulf %171, %185 : vector<16x128xf32>
      %187 = vector.broadcast %176 : vector<1x128xf32> to vector<16x128xf32>
      %188 = arith.mulf %186, %187 : vector<16x128xf32>
      %c0_75 = arith.constant 0 : index
      %c0_76 = arith.constant 0 : index
      %189 = vector.load %arg10[%c0_75, %c0_76] : memref<16x128xf32, #tpu.memory_space<vmem>>, vector<16x128xf32>
      tpu.vector_store %arg10[%c0_75, %c0_76], %188 {strides = array<i32>} : memref<16x128xf32, #tpu.memory_space<vmem>>, vector<16x128xf32>,
    } else {
    }
    return
  }
  func.func @transform_0(%arg0: i32) -> (i32, i32) {
    %c0_i32 = arith.constant 0 : i32
    %c0_i32_0 = arith.constant 0 : i32
    %c0_i32_1 = arith.constant 0 : i32
    return %c0_i32, %c0_i32_0 : i32, i32
  }
  func.func @transform_1(%arg0: i32) -> (i32, i32, i32) {
    %c0_i32 = arith.constant 0 : i32
    %c0_i32_0 = arith.constant 0 : i32
    %c0_i32_1 = arith.constant 0 : i32
    return %arg0, %c0_i32, %c0_i32_0 : i32, i32, i32
  }
  func.func @transform_2(%arg0: i32) -> (i32, i32, i32) {
    %c0_i32 = arith.constant 0 : i32
    %c0_i32_0 = arith.constant 0 : i32
    %c0_i32_1 = arith.constant 0 : i32
    return %arg0, %c0_i32, %c0_i32_0 : i32, i32, i32
  }
  func.func @transform_3(%arg0: i32) -> (i32, i32, i32) {
    %c0_i32 = arith.constant 0 : i32
    %c0_i32_0 = arith.constant 0 : i32
    %c0_i32_1 = arith.constant 0 : i32
    return %arg0, %c0_i32, %c0_i32_0 : i32, i32, i32
  }
  func.func @transform_4(%arg0: i32) -> (i32, i32, i32) {
    %c0_i32 = arith.constant 0 : i32
    %c0_i32_0 = arith.constant 0 : i32
    %c0_i32_1 = arith.constant 0 : i32
    return %arg0, %c0_i32, %c0_i32_0 : i32, i32, i32
  }
  func.func @transform_5(%arg0: i32) -> (i32, i32, i32) {
    %c0_i32 = arith.constant 0 : i32
    %c0_i32_0 = arith.constant 0 : i32
    %c0_i32_1 = arith.constant 0 : i32
    return %arg0, %c0_i32, %c0_i32_0 : i32, i32, i32
  }
  func.func @transform_6(%arg0: i32) -> (i32, i32) {
    %c0_i32 = arith.constant 0 : i32
    %c0_i32_0 = arith.constant 0 : i32
    %c0_i32_1 = arith.constant 0 : i32
    return %c0_i32, %c0_i32_0 : i32, i32
  }
  func.func @transform_7(%arg0: i32) -> (i32, i32) {
    %c0_i32 = arith.constant 0 : i32
    %c0_i32_0 = arith.constant 0 : i32
    %c0_i32_1 = arith.constant 0 : i32
    return %c0_i32, %c0_i32_0 : i32, i32
  }
  func.func @transform_8(%arg0: i32) -> (i32, i32) {
    %c0_i32 = arith.constant 0 : i32
    %c0_i32_0 = arith.constant 0 : i32
    %c0_i32_1 = arith.constant 0 : i32
    return %c0_i32, %c0_i32_0 : i32, i32
  }
  func.func @transform_9(%arg0: i32) -> (i32, i32) {
    %c0_i32 = arith.constant 0 : i32
    %c0_i32_0 = arith.constant 0 : i32
    %c0_i32_1 = arith.constant 0 : i32
    return %c0_i32, %c0_i32_0 : i32, i32
  }
}

</mosaic_0001>

<llo_original>
// kernel: tpu_custom_call.1
$region0: #{tpu_custom_call.1}
  #allocation0 [shape = 'u32[]', space=smem, size = 0x4, offset = 0x4, fixed_abs, tag = 'smem constant byte address 0x4 - core index']
  #allocation1 [shape = 'u32[144,128]{1,0:T(1,128)}', space=vmem, size = 0x12000, scoped, tag = 'internal scratch']
  #allocation2 [shape = 'f32[16,128]{1,0:T(8,128)}', space=vmem, size = 0x2000, scoped, tag = 'scratch operand']
  #allocation3 [shape = 'f32[16,128]{1,0:T(8,128)}', space=vmem, size = 0x2000, scoped, tag = 'scratch operand']
  %s0 = inlined_call_operand.hbm [shape: f32[16,128], index: 0, kind: input, shape index: {}]
  %s1 = inlined_call_operand.hbm [shape: f32[3,128,384], index: 1, kind: input, shape index: {}]
  %s2 = inlined_call_operand.hbm [shape: f32[3,128,128], index: 2, kind: input, shape index: {}]
  %s3 = inlined_call_operand.hbm [shape: f32[3,128,512], index: 3, kind: input, shape index: {}]
  %s4 = inlined_call_operand.hbm [shape: f32[3,256,128], index: 4, kind: input, shape index: {}]
  %s5 = inlined_call_operand.vmem [shape: f32[3,2,128], index: 5, kind: input, shape index: {}]
  %s6 = inlined_call_operand.hbm [shape: f32[32,128], index: 6, kind: input, shape index: {}]
  %s7 = inlined_call_operand.hbm [shape: f32[16,16], index: 7, kind: input, shape index: {}]
  %s8 = inlined_call_operand.vmem [shape: f32[1,128], index: 8, kind: input, shape index: {}]
  %s9 = inlined_call_operand.hbm [shape: f32[16,128], index: 9, kind: output, shape index: {}]
  %s10 = sld [smem:[#allocation0]]
  $region105: #{tpu_custom_call.1} parent=0
    _
  %s12 = ssub.s32 1, %s10
  %s13 = scalar_select 0, %s12, %s10
  $region1: #{tpu_custom_call.1} parent=0
    #allocation4 [shape = 'u8[8192]{0}', space=vmem, size = 0x2000, scoped, tag = 'input window, operand 0, single buffered']
    #allocation5 [shape = 's32[2]{0}', space=sflag, size = 0x8, scoped, tag = 'scoped memory for tpu_custom_call.1']
    #allocation6 [shape = 's32[2]{0}', space=sflag, size = 0x8, scoped, tag = 'scoped memory for tpu_custom_call.1']
    #allocation7 [shape = 'u8[393216]{0}', space=vmem, size = 0x60000, scoped, tag = 'input window, operand 1']
    #allocation8 [shape = 's32[2]{0}', space=sflag, size = 0x8, scoped, tag = 'scoped memory for tpu_custom_call.1']
    #allocation9 [shape = 'u8[131072]{0}', space=vmem, size = 0x20000, scoped, tag = 'input window, operand 2']
    #allocation10 [shape = 'u8[524288]{0}', space=vmem, size = 0x80000, scoped, tag = 'input window, operand 3']
    #allocation11 [shape = 's32[2]{0}', space=sflag, size = 0x8, scoped, tag = 'scoped memory for tpu_custom_call.1']
    #allocation12 [shape = 'u8[262144]{0}', space=vmem, size = 0x40000, scoped, tag = 'input window, operand 4']
    #allocation13 [shape = 'u8[16384]{0}', space=vmem, size = 0x4000, scoped, tag = 'input window, operand 6, single buffered']
    #allocation14 [shape = 's32[1]{0}', space=sflag, size = 0x4, scoped, tag = 'scoped memory for tpu_custom_call.1']
    #allocation15 [shape = 'u8[8192]{0}', space=vmem, size = 0x2000, scoped, tag = 'input window, operand 7, single buffered']
    #allocation16 [shape = 'u8[8192]{0}', space=vmem, size = 0x2000, scoped, tag = 'output window, operand 0, single buffered']
    %14 = vsyncpa [#allocation5], 0
    %15 = vsyncpa [#allocation8], 0
    %s16 = scalar_lea.sflag [#allocation8], 1
    %17 = vsyncpa %s16, 0
    %18 = vsyncpa [#allocation11], 0
    %s19 = scalar_lea.sflag [#allocation11], 1
    %20 = vsyncpa %s19, 0
    %21 = vsyncpa [#allocation14], 0
    %22 = vsyncpa [#allocation6], 0
    loop: start=0, step=1, limit=5
    $region2: #{tpu_custom_call.1} parent=1 // loop_pre_header
      _
    $region3: #{tpu_custom_call.1} parent=1 // loop_header
      %s24 = sphi 0, %s28
      %p25 = scmp.ge.s32.totalorder %s24, 5
      %s32 = sphi 0, %s32
      %s34 = sphi 0, %s32
      %s35 = sphi 0, %s34
      %s49 = sphi 0, %s35
      %s55 = sphi 0, %s57
      %s58 = sphi 0, %s55
      %s59 = sphi 0, %s58
      %s75 = sphi 0, %s59
      %s81 = sphi 0, %s83
      %s84 = sphi 0, %s81
      %s85 = sphi 0, %s84
      %s101 = sphi 0, %s85
      %s107 = sphi 0, %s109
      %s110 = sphi 0, %s107
      %s111 = sphi 0, %s110
      %s127 = sphi 0, %s111
      %s133 = sphi 0, %s135
      %s136 = sphi 0, %s133
      %s137 = sphi 0, %s136
      %s153 = sphi 0, %s137
      %s159 = sphi 0, %s161
      %s162 = sphi 0, %s159
      %s163 = sphi 0, %s162
      %s179 = sphi 0, %s163
      %s183 = sphi 0, %s183
      %s185 = sphi 0, %s183
      %s186 = sphi 0, %s185
      %s200 = sphi 0, %s186
      %s204 = sphi 0, %s204
      %s206 = sphi 0, %s204
      %s207 = sphi 0, %s206
      %s221 = sphi 0, %s207
      %s225 = sphi 0, %s225
      %s227 = sphi 0, %s225
      %s228 = sphi 0, %s227
      %s242 = sphi 0, %s228
      %s246 = sphi 0, %s246
      %s248 = sphi 0, %s246
      %s249 = sphi 0, %s248
      %s263 = sphi 0, %s249
    $region4: #{tpu_custom_call.1} parent=1 // loop_header_branch
      %27 = sbr.rel (%p25) target = $region8
    $region5: #{tpu_custom_call.1} parent=1 // loop_body
      %s29 = ssub.s32 %s24, 1
      %s30 = ssub.s32 %s24, 2
      %s31 = sadd.s32 %s24, 1
      %s33 = sadd.s32 %s32, 1
      %p36 = scmp.eq.s32.totalorder %s24, 2
      %p37 = scmp.ne.s32.totalorder %s32, %s34
      %p38 = scmp.eq.s32.totalorder %s24, 0
      %p39 = por %p37, %p38
      %p40 = scmp.ne.s32.totalorder %s32, %s34
      %p41 = scmp.eq.s32.totalorder %s29, 2
      %p42 = por %p40, %p41
      %p43 = scmp.ne.s32.totalorder %s34, %s35
      %p44 = scmp.eq.s32.totalorder %s29, 0
      %p45 = por %p43, %p44
      %p46 = scmp.ne.s32.totalorder %s34, %s35
      %p47 = scmp.eq.s32.totalorder %s30, 2
      %p48 = por %p46, %p47
      %p50 = scmp.ne.s32.totalorder %s35, %s49
      %p51 = scmp.eq.s32.totalorder %s30, 0
      %p52 = por %p50, %p51
      %s53 = ssub.s32 %s24, %s31
      %p54 = scmp.eq.s32.totalorder %s53, 0
      %s56 = sadd.s32 %s55, 1
      %s57 = scalar_select %p54, %s55, %s56
      %p60 = pneg %p54
      %p61 = scmp.eq.s32.totalorder %s24, 2
      %p62 = por %p60, %p61
      %p63 = scmp.ne.s32.totalorder %s55, %s58
      %p64 = scmp.eq.s32.totalorder %s24, 0
      %p65 = por %p63, %p64
      %p66 = scmp.ne.s32.totalorder %s55, %s58
      %p67 = scmp.eq.s32.totalorder %s29, 2
      %p68 = por %p66, %p67
      %p69 = scmp.ne.s32.totalorder %s58, %s59
      %p70 = scmp.eq.s32.totalorder %s29, 0
      %p71 = por %p69, %p70
      %p72 = scmp.ne.s32.totalorder %s58, %s59
      %p73 = scmp.eq.s32.totalorder %s30, 2
      %p74 = por %p72, %p73
      %p76 = scmp.ne.s32.totalorder %s59, %s75
      %p77 = scmp.eq.s32.totalorder %s30, 0
      %p78 = por %p76, %p77
      %s79 = ssub.s32 %s24, %s31
      %p80 = scmp.eq.s32.totalorder %s79, 0
      %s82 = sadd.s32 %s81, 1
      %s83 = scalar_select %p80, %s81, %s82
      %p86 = pneg %p80
      %p87 = scmp.eq.s32.totalorder %s24, 2
      %p88 = por %p86, %p87
      %p89 = scmp.ne.s32.totalorder %s81, %s84
      %p90 = scmp.eq.s32.totalorder %s24, 0
      %p91 = por %p89, %p90
      %p92 = scmp.ne.s32.totalorder %s81, %s84
      %p93 = scmp.eq.s32.totalorder %s29, 2
      %p94 = por %p92, %p93
      %p95 = scmp.ne.s32.totalorder %s84, %s85
      %p96 = scmp.eq.s32.totalorder %s29, 0
      %p97 = por %p95, %p96
      %p98 = scmp.ne.s32.totalorder %s84, %s85
      %p99 = scmp.eq.s32.totalorder %s30, 2
      %p100 = por %p98, %p99
      %p102 = scmp.ne.s32.totalorder %s85, %s101
      %p103 = scmp.eq.s32.totalorder %s30, 0
      %p104 = por %p102, %p103
      %s105 = ssub.s32 %s24, %s31
      %p106 = scmp.eq.s32.totalorder %s105, 0
      %s108 = sadd.s32 %s107, 1
      %s109 = scalar_select %p106, %s107, %s108
      %p112 = pneg %p106
      %p113 = scmp.eq.s32.totalorder %s24, 2
      %p114 = por %p112, %p113
      %p115 = scmp.ne.s32.totalorder %s107, %s110
      %p116 = scmp.eq.s32.totalorder %s24, 0
      %p117 = por %p115, %p116
      %p118 = scmp.ne.s32.totalorder %s107, %s110
      %p119 = scmp.eq.s32.totalorder %s29, 2
      %p120 = por %p118, %p119
      %p121 = scmp.ne.s32.totalorder %s110, %s111
      %p122 = scmp.eq.s32.totalorder %s29, 0
      %p123 = por %p121, %p122
      %p124 = scmp.ne.s32.totalorder %s110, %s111
      %p125 = scmp.eq.s32.totalorder %s30, 2
      %p126 = por %p124, %p125
      %p128 = scmp.ne.s32.totalorder %s111, %s127
      %p129 = scmp.eq.s32.totalorder %s30, 0
      %p130 = por %p128, %p129
      %s131 = ssub.s32 %s24, %s31
      %p132 = scmp.eq.s32.totalorder %s131, 0
      %s134 = sadd.s32 %s133, 1
      %s135 = scalar_select %p132, %s133, %s134
      %p138 = pneg %p132
      %p139 = scmp.eq.s32.totalorder %s24, 2
      %p140 = por %p138, %p139
      %p141 = scmp.ne.s32.totalorder %s133, %s136
      %p142 = scmp.eq.s32.totalorder %s24, 0
      %p143 = por %p141, %p142
      %p144 = scmp.ne.s32.totalorder %s133, %s136
      %p145 = scmp.eq.s32.totalorder %s29, 2
      %p146 = por %p144, %p145
      %p147 = scmp.ne.s32.totalorder %s136, %s137
      %p148 = scmp.eq.s32.totalorder %s29, 0
      %p149 = por %p147, %p148
      %p150 = scmp.ne.s32.totalorder %s136, %s137
      %p151 = scmp.eq.s32.totalorder %s30, 2
      %p152 = por %p150, %p151
      %p154 = scmp.ne.s32.totalorder %s137, %s153
      %p155 = scmp.eq.s32.totalorder %s30, 0
      %p156 = por %p154, %p155
      %s157 = ssub.s32 %s24, %s31
      %p158 = scmp.eq.s32.totalorder %s157, 0
      %s160 = sadd.s32 %s159, 1
      %s161 = scalar_select %p158, %s159, %s160
      %p164 = pneg %p158
      %p165 = scmp.eq.s32.totalorder %s24, 2
      %p166 = por %p164, %p165
      %p167 = scmp.ne.s32.totalorder %s159, %s162
      %p168 = scmp.eq.s32.totalorder %s24, 0
      %p169 = por %p167, %p168
      %p170 = scmp.ne.s32.totalorder %s159, %s162
      %p171 = scmp.eq.s32.totalorder %s29, 2
      %p172 = por %p170, %p171
      %p173 = scmp.ne.s32.totalorder %s162, %s163
      %p174 = scmp.eq.s32.totalorder %s29, 0
      %p175 = por %p173, %p174
      %p176 = scmp.ne.s32.totalorder %s162, %s163
      %p177 = scmp.eq.s32.totalorder %s30, 2
      %p178 = por %p176, %p177
      %p180 = scmp.ne.s32.totalorder %s163, %s179
      %p181 = scmp.eq.s32.totalorder %s30, 0
      %p182 = por %p180, %p181
      %s184 = sadd.s32 %s183, 1
      %p187 = scmp.eq.s32.totalorder %s24, 2
      %p188 = scmp.ne.s32.totalorder %s183, %s185
      %p189 = scmp.eq.s32.totalorder %s24, 0
      %p190 = por %p188, %p189
      %p191 = scmp.ne.s32.totalorder %s183, %s185
      %p192 = scmp.eq.s32.totalorder %s29, 2
      %p193 = por %p191, %p192
      %p194 = scmp.ne.s32.totalorder %s185, %s186
      %p195 = scmp.eq.s32.totalorder %s29, 0
      %p196 = por %p194, %p195
      %p197 = scmp.ne.s32.totalorder %s185, %s186
      %p198 = scmp.eq.s32.totalorder %s30, 2
      %p199 = por %p197, %p198
      %p201 = scmp.ne.s32.totalorder %s186, %s200
      %p202 = scmp.eq.s32.totalorder %s30, 0
      %p203 = por %p201, %p202
      %s205 = sadd.s32 %s204, 1
      %p208 = scmp.eq.s32.totalorder %s24, 2
      %p209 = scmp.ne.s32.totalorder %s204, %s206
      %p210 = scmp.eq.s32.totalorder %s24, 0
      %p211 = por %p209, %p210
      %p212 = scmp.ne.s32.totalorder %s204, %s206
      %p213 = scmp.eq.s32.totalorder %s29, 2
      %p214 = por %p212, %p213
      %p215 = scmp.ne.s32.totalorder %s206, %s207
      %p216 = scmp.eq.s32.totalorder %s29, 0
      %p217 = por %p215, %p216
      %p218 = scmp.ne.s32.totalorder %s206, %s207
      %p219 = scmp.eq.s32.totalorder %s30, 2
      %p220 = por %p218, %p219
      %p222 = scmp.ne.s32.totalorder %s207, %s221
      %p223 = scmp.eq.s32.totalorder %s30, 0
      %p224 = por %p222, %p223
      %s226 = sadd.s32 %s225, 1
      %p229 = scmp.eq.s32.totalorder %s24, 2
      %p230 = scmp.ne.s32.totalorder %s225, %s227
      %p231 = scmp.eq.s32.totalorder %s24, 0
      %p232 = por %p230, %p231
      %p233 = scmp.ne.s32.totalorder %s225, %s227
      %p234 = scmp.eq.s32.totalorder %s29, 2
      %p235 = por %p233, %p234
      %p236 = scmp.ne.s32.totalorder %s227, %s228
      %p237 = scmp.eq.s32.totalorder %s29, 0
      %p238 = por %p236, %p237
      %p239 = scmp.ne.s32.totalorder %s227, %s228
      %p240 = scmp.eq.s32.totalorder %s30, 2
      %p241 = por %p239, %p240
      %p243 = scmp.ne.s32.totalorder %s228, %s242
      %p244 = scmp.eq.s32.totalorder %s30, 0
      %p245 = por %p243, %p244
      %s247 = sadd.s32 %s246, 1
      %p250 = scmp.eq.s32.totalorder %s24, 2
      %p251 = scmp.ne.s32.totalorder %s246, %s248
      %p252 = scmp.eq.s32.totalorder %s24, 0
      %p253 = por %p251, %p252
      %p254 = scmp.ne.s32.totalorder %s246, %s248
      %p255 = scmp.eq.s32.totalorder %s29, 2
      %p256 = por %p254, %p255
      %p257 = scmp.ne.s32.totalorder %s248, %s249
      %p258 = scmp.eq.s32.totalorder %s29, 0
      %p259 = por %p257, %p258
      %p260 = scmp.ne.s32.totalorder %s248, %s249
      %p261 = scmp.eq.s32.totalorder %s30, 2
      %p262 = por %p260, %p261
      %p264 = scmp.ne.s32.totalorder %s249, %s263
      %p265 = scmp.eq.s32.totalorder %s30, 0
      %p266 = por %p264, %p265
      %p267 = scmp.le.s32.totalorder 1, %s24
      %p268 = scmp.lt.s32.totalorder %s24, 4
      %p269 = pnand %p267, %p268
      %p270 = pneg %p269
      // Predicated region
      $region9: #{tpu_custom_call.1} parent=5 // pred_check
        _
      $region10: #{tpu_custom_call.1} parent=5 // pred_check_branch
        %272 = sbr.rel (%p269) target = $region12
      $region11: #{tpu_custom_call.1} parent=5 // pred_region
        %s273 = ssub.s32 %s24, 1
        // Predicated region
        $region13: #{tpu_custom_call.1} parent=11 // pred_check
          %p274 = pneg %p45
        $region14: #{tpu_custom_call.1} parent=11 // pred_check_branch
          %276 = sbr.rel (%p274) target = $region16
        $region15: #{tpu_custom_call.1} parent=11 // pred_region
          %s278 = ssub.s32 256, 256
          %279 = vsyncadd [#allocation5], %s278
          %s280 = sshll.u32 [#allocation4], 4
          %s281 = int_to_ptr.vmem [resolvable:$true] %s280
          %286 = dma.hbm_to_vmem [thread:$0]  %s0, 256, %s281, [#allocation5], 128, 128, 8
        $region16: #{tpu_custom_call.1} parent=11 // pred_fallthru
          _
        // Predicated region
        $region17: #{tpu_custom_call.1} parent=11 // pred_check
          %p287 = pneg %p196
        $region18: #{tpu_custom_call.1} parent=11 // pred_check_branch
          %289 = sbr.rel (%p287) target = $region20
        $region19: #{tpu_custom_call.1} parent=11 // pred_region
          %s291 = ssub.s32 512, 512
          %292 = vsyncadd [#allocation14], %s291
          %s293 = sshll.u32 [#allocation13], 4
          %s294 = int_to_ptr.vmem [resolvable:$true] %s293
          %299 = dma.hbm_to_vmem [thread:$0]  %s6, 512, %s294, [#allocation14], 128, 128, 8
        $region20: #{tpu_custom_call.1} parent=11 // pred_fallthru
          _
        // Predicated region
        $region21: #{tpu_custom_call.1} parent=11 // pred_check
          %p300 = pneg %p217
        $region22: #{tpu_custom_call.1} parent=11 // pred_check_branch
          %302 = sbr.rel (%p300) target = $region24
        $region23: #{tpu_custom_call.1} parent=11 // pred_region
          %s304 = ssub.s32 256, 256
          %305 = vsyncadd [#allocation14], %s304
          %s306 = sshll.u32 [#allocation15], 4
          %s307 = int_to_ptr.vmem [resolvable:$true] %s306
          %312 = dma.hbm_to_vmem [thread:$0]  %s7, 256, %s307, [#allocation14], 128, 128, 8
        $region24: #{tpu_custom_call.1} parent=11 // pred_fallthru
          _
        // Predicated region
        $region25: #{tpu_custom_call.1} parent=11 // pred_check
          %p313 = pneg %p238
        $region26: #{tpu_custom_call.1} parent=11 // pred_check_branch
          %315 = sbr.rel (%p313) target = $region28
        $region27: #{tpu_custom_call.1} parent=11 // pred_region
          _
        $region28: #{tpu_custom_call.1} parent=11 // pred_fallthru
          _
      $region12: #{tpu_custom_call.1} parent=5 // pred_fallthru
        _
      %p316 = scmp.lt.s32.totalorder %s24, 3
      // Predicated region
      $region29: #{tpu_custom_call.1} parent=5 // pred_check
        %p317 = pneg %p316
      $region30: #{tpu_custom_call.1} parent=5 // pred_check_branch
        %319 = sbr.rel (%p317) target = $region32
      $region31: #{tpu_custom_call.1} parent=5 // pred_region
        // Predicated region
        $region33: #{tpu_custom_call.1} parent=31 // pred_check
          %p320 = pneg %p65
        $region34: #{tpu_custom_call.1} parent=31 // pred_check_branch
          %322 = sbr.rel (%p320) target = $region36
        $region35: #{tpu_custom_call.1} parent=31 // pred_region
          %s323 = sand.u32 %s24, 1
          %s324 = scalar_lea.sflag [#allocation8], %s323
          %s325 = sand.u32 %s55, 1
          %s326 = smul.addr %s325, 384
          %s327 = scalar_lea.vmem [#allocation7], %s326
          %s329 = ssub.s32 6144, 6144
          %330 = vsyncadd %s324, %s329
          %s331 = smul.addr %s24, 48
          %s332 = smul.addr %s331, 128
          %s333 = scalar_lea.hbm %s1, %s332
          %s334 = sshll.u32 %s327, 4
          %s335 = int_to_ptr.vmem [resolvable:$true] %s334
          %340 = dma.hbm_to_vmem [thread:$0]  %s333, 6144, %s335, %s324, 384, 384, 24
        $region36: #{tpu_custom_call.1} parent=31 // pred_fallthru
          _
        // Predicated region
        $region37: #{tpu_custom_call.1} parent=31 // pred_check
          %p341 = pneg %p91
        $region38: #{tpu_custom_call.1} parent=31 // pred_check_branch
          %343 = sbr.rel (%p341) target = $region40
        $region39: #{tpu_custom_call.1} parent=31 // pred_region
          %s344 = sand.u32 %s24, 1
          %s345 = scalar_lea.sflag [#allocation8], %s344
          %s346 = sand.u32 %s81, 1
          %s347 = smul.addr %s346, 128
          %s348 = scalar_lea.vmem [#allocation9], %s347
          %s350 = ssub.s32 2048, 2048
          %351 = vsyncadd %s345, %s350
          %s352 = smul.addr %s24, 16
          %s353 = smul.addr %s352, 128
          %s354 = scalar_lea.hbm %s2, %s353
          %s355 = sshll.u32 %s348, 4
          %s356 = int_to_ptr.vmem [resolvable:$true] %s355
          %361 = dma.hbm_to_vmem [thread:$0]  %s354, 2048, %s356, %s345, 128, 128, 8
        $region40: #{tpu_custom_call.1} parent=31 // pred_fallthru
          _
        // Predicated region
        $region41: #{tpu_custom_call.1} parent=31 // pred_check
          %p362 = pneg %p117
        $region42: #{tpu_custom_call.1} parent=31 // pred_check_branch
          %364 = sbr.rel (%p362) target = $region44
        $region43: #{tpu_custom_call.1} parent=31 // pred_region
          %s365 = sand.u32 %s24, 1
          %s366 = scalar_lea.sflag [#allocation11], %s365
          %s367 = sand.u32 %s107, 1
          %s368 = smul.addr %s367, 512
          %s369 = scalar_lea.vmem [#allocation10], %s368
          %s371 = ssub.s32 8192, 8192
          %372 = vsyncadd %s366, %s371
          %s373 = smul.addr %s24, 64
          %s374 = smul.addr %s373, 128
          %s375 = scalar_lea.hbm %s3, %s374
          %s376 = sshll.u32 %s369, 4
          %s377 = int_to_ptr.vmem [resolvable:$true] %s376
          %382 = dma.hbm_to_vmem [thread:$0]  %s375, 8192, %s377, %s366, 512, 512, 32
        $region44: #{tpu_custom_call.1} parent=31 // pred_fallthru
          _
        // Predicated region
        $region45: #{tpu_custom_call.1} parent=31 // pred_check
          %p383 = pneg %p143
        $region46: #{tpu_custom_call.1} parent=31 // pred_check_branch
          %385 = sbr.rel (%p383) target = $region48
        $region47: #{tpu_custom_call.1} parent=31 // pred_region
          %s386 = sand.u32 %s24, 1
          %s387 = scalar_lea.sflag [#allocation11], %s386
          %s388 = sand.u32 %s133, 1
          %s389 = smul.addr %s388, 256
          %s390 = scalar_lea.vmem [#allocation12], %s389
          %s392 = ssub.s32 4096, 4096
          %393 = vsyncadd %s387, %s392
          %s394 = smul.addr %s24, 32
          %s395 = smul.addr %s394, 128
          %s396 = scalar_lea.hbm %s4, %s395
          %s397 = sshll.u32 %s390, 4
          %s398 = int_to_ptr.vmem [resolvable:$true] %s397
          %403 = dma.hbm_to_vmem [thread:$0]  %s396, 4096, %s398, %s387, 128, 128, 8
        $region48: #{tpu_custom_call.1} parent=31 // pred_fallthru
          _
        // Predicated region
        $region49: #{tpu_custom_call.1} parent=31 // pred_check
          %p404 = pneg %p169
        $region50: #{tpu_custom_call.1} parent=31 // pred_check_branch
          %406 = sbr.rel (%p404) target = $region52
        $region51: #{tpu_custom_call.1} parent=31 // pred_region
          %p407 = scmp.lt.s32.totalorder %s24, 2
          %s408 = scalar_select %p407, %s24, 2
          %s409 = smul.addr %s408, 2
          %s410 = scalar_lea.vmem %s5, %s409
        $region52: #{tpu_custom_call.1} parent=31 // pred_fallthru
          _
      $region32: #{tpu_custom_call.1} parent=5 // pred_fallthru
        _
      %p411 = scmp.le.s32.totalorder 1, %s24
      %p412 = scmp.lt.s32.totalorder %s24, 4
      %p413 = pnand %p411, %p412
      %p414 = pneg %p413
      // Predicated region
      $region53: #{tpu_custom_call.1} parent=5 // pred_check
        _
      $region54: #{tpu_custom_call.1} parent=5 // pred_check_branch
        %416 = sbr.rel (%p413) target = $region56
      $region55: #{tpu_custom_call.1} parent=5 // pred_region
        %s417 = ssub.s32 %s24, 1
        // Predicated region
        $region57: #{tpu_custom_call.1} parent=55 // pred_check
          %p418 = pneg %p45
        $region58: #{tpu_custom_call.1} parent=55 // pred_check_branch
          %420 = sbr.rel (%p418) target = $region60
        $region59: #{tpu_custom_call.1} parent=55 // pred_region
          %421 = dma.done [#allocation5], 256
        $region60: #{tpu_custom_call.1} parent=55 // pred_fallthru
          _
        %s422 = sand.u32 %s29, 1
        %s423 = scalar_lea.sflag [#allocation8], %s422
        %s424 = sand.u32 %s58, 1
        %s425 = smul.addr %s424, 384
        %s426 = scalar_lea.vmem [#allocation7], %s425
        // Predicated region
        $region61: #{tpu_custom_call.1} parent=55 // pred_check
          %p427 = pneg %p71
        $region62: #{tpu_custom_call.1} parent=55 // pred_check_branch
          %429 = sbr.rel (%p427) target = $region64
        $region63: #{tpu_custom_call.1} parent=55 // pred_region
          %430 = dma.done %s423, 6144
        $region64: #{tpu_custom_call.1} parent=55 // pred_fallthru
          _
        %s431 = sand.u32 %s29, 1
        %s432 = scalar_lea.sflag [#allocation8], %s431
        %s433 = sand.u32 %s84, 1
        %s434 = smul.addr %s433, 128
        %s435 = scalar_lea.vmem [#allocation9], %s434
        // Predicated region
        $region65: #{tpu_custom_call.1} parent=55 // pred_check
          %p436 = pneg %p97
        $region66: #{tpu_custom_call.1} parent=55 // pred_check_branch
          %438 = sbr.rel (%p436) target = $region68
        $region67: #{tpu_custom_call.1} parent=55 // pred_region
          %439 = dma.done %s432, 2048
        $region68: #{tpu_custom_call.1} parent=55 // pred_fallthru
          _
        %s440 = sand.u32 %s29, 1
        %s441 = scalar_lea.sflag [#allocation11], %s440
        %s442 = sand.u32 %s110, 1
        %s443 = smul.addr %s442, 512
        %s444 = scalar_lea.vmem [#allocation10], %s443
        // Predicated region
        $region69: #{tpu_custom_call.1} parent=55 // pred_check
          %p445 = pneg %p123
        $region70: #{tpu_custom_call.1} parent=55 // pred_check_branch
          %447 = sbr.rel (%p445) target = $region72
        $region71: #{tpu_custom_call.1} parent=55 // pred_region
          %448 = dma.done %s441, 8192
        $region72: #{tpu_custom_call.1} parent=55 // pred_fallthru
          _
        %s449 = sand.u32 %s29, 1
        %s450 = scalar_lea.sflag [#allocation11], %s449
        %s451 = sand.u32 %s136, 1
        %s452 = smul.addr %s451, 256
        %s453 = scalar_lea.vmem [#allocation12], %s452
        // Predicated region
        $region73: #{tpu_custom_call.1} parent=55 // pred_check
          %p454 = pneg %p149
        $region74: #{tpu_custom_call.1} parent=55 // pred_check_branch
          %456 = sbr.rel (%p454) target = $region76
        $region75: #{tpu_custom_call.1} parent=55 // pred_region
          %457 = dma.done %s450, 4096
        $region76: #{tpu_custom_call.1} parent=55 // pred_fallthru
          _
        // Predicated region
        $region77: #{tpu_custom_call.1} parent=55 // pred_check
          %p458 = pneg %p196
        $region78: #{tpu_custom_call.1} parent=55 // pred_check_branch
          %460 = sbr.rel (%p458) target = $region80
        $region79: #{tpu_custom_call.1} parent=55 // pred_region
          %461 = dma.done [#allocation14], 512
        $region80: #{tpu_custom_call.1} parent=55 // pred_fallthru
          _
        // Predicated region
        $region81: #{tpu_custom_call.1} parent=55 // pred_check
          %p462 = pneg %p217
        $region82: #{tpu_custom_call.1} parent=55 // pred_check_branch
          %464 = sbr.rel (%p462) target = $region84
        $region83: #{tpu_custom_call.1} parent=55 // pred_region
          %465 = dma.done [#allocation14], 256
        $region84: #{tpu_custom_call.1} parent=55 // pred_fallthru
          _
        %p466 = pneg %p45
        %p467 = pneg %p42
        %s468 = sand.u32 %s29, 1
        %s469 = scalar_lea.sflag [#allocation8], %s468
        %s470 = sand.u32 %s58, 1
        %s471 = smul.addr %s470, 384
        %s472 = scalar_lea.vmem [#allocation7], %s471
        %p473 = pneg %p71
        %p474 = pneg %p68
        %s475 = sand.u32 %s29, 1
        %s476 = scalar_lea.sflag [#allocation8], %s475
        %s477 = sand.u32 %s84, 1
        %s478 = smul.addr %s477, 128
        %s479 = scalar_lea.vmem [#allocation9], %s478
        %p480 = pneg %p97
        %p481 = pneg %p94
        %s482 = sand.u32 %s29, 1
        %s483 = scalar_lea.sflag [#allocation11], %s482
        %s484 = sand.u32 %s110, 1
        %s485 = smul.addr %s484, 512
        %s486 = scalar_lea.vmem [#allocation10], %s485
        %p487 = pneg %p123
        %p488 = pneg %p120
        %s489 = sand.u32 %s29, 1
        %s490 = scalar_lea.sflag [#allocation11], %s489
        %s491 = sand.u32 %s136, 1
        %s492 = smul.addr %s491, 256
        %s493 = scalar_lea.vmem [#allocation12], %s492
        %p494 = pneg %p149
        %p495 = pneg %p146
        %p496 = scmp.lt.s32.totalorder %s29, 2
        %s497 = scalar_select %p496, %s29, 2
        %s498 = smul.addr %s497, 2
        %s499 = scalar_lea.vmem %s5, %s498
        %p500 = pneg %p175
        %p501 = pneg %p172
        %p502 = pneg %p196
        %p503 = pneg %p193
        %p504 = pneg %p217
        %p505 = pneg %p214
        %p506 = pneg %p238
        %p507 = pneg %p235
        %p508 = pneg %p259
        %p509 = pneg %p256
        %p510 = scmp.lt.s32.totalorder %s29, 2
        %s511 = scalar_select %p510, %s29, 2
        %s512 = smul.addr %s511, 2
        %s513 = scalar_lea.vmem %s5, %s512
        %p514 = scmp.eq.s32.totalorder %s29, 0
        // Predicated region
        $region85: #{tpu_custom_call.1} parent=55 // pred_check
          %p515 = pneg %p514
        $region86: #{tpu_custom_call.1} parent=55 // pred_check_branch
          %517 = sbr.rel (%p515) target = $region88
        $region87: #{tpu_custom_call.1} parent=55 // pred_region
          %v518 = vld [vmem:[#allocation4] sm:$0xff]
          %v519 = vld [vmem:[#allocation4 + $0x8] sm:$0xff]
          %520 = vst [vmem:[#allocation2] sm:$0xff] %v518
          %521 = vst [vmem:[#allocation2 + $0x8] sm:$0xff] %v519
        $region88: #{tpu_custom_call.1} parent=55 // pred_fallthru
          _
        %v522 = vld [vmem:[#allocation2] sm:$0xff]
        %v523 = vld [vmem:[#allocation2 + $0x8] sm:$0xff]
        %v524 = vld [vmem:[%s513] sm:$0x3]
        %v525 = vld [vmem:[#allocation13] sm:$0xff]
        %v526 = vld [vmem:[#allocation13 + $0x8] sm:$0xff]
        %v527 = vld [vmem:[#allocation13 + $0x10] sm:$0xff]
        %v528 = vld [vmem:[#allocation13 + $0x18] sm:$0xff]
        %v529 = vld [vmem:[#allocation15] sm:$0xff]
        %v530 = vld [vmem:[#allocation15 + $0x8] sm:$0xff]
        %v531 = vlaneseq
        %v532 = vand.u32 %v531, 127
        %vm533 = vcmp.lt.s32.totalorder %v532, 0
        %v534 = vsub.s32 0, %v532
        %v535 = vsel %vm533, %v534, %v532
        %v536 = vshrl.u32 %v535, 1
        %v537 = vand.u32 %v535, 1
        %v538 = vsub.s32 0, %v537
        %v539 = vsel %vm533, %v538, %v537
        %vm540 = vcmp.ne.s32.totalorder %v539, 0
        %vm541 = vcmp.lt.s32.totalorder %v539, 0
        %vm542 = vmand %vm541, %vm540
        %v543 = vadd.s32 %v539, 2
        %v544 = vsel %vm542, %v543, %v539
        %vm545 = vcmp.eq.s32.totalorder %v544, 0
        %v546 = vmul.f32 %v522, %v522
        %v547 = vmul.f32 %v523, %v523
        %548 = vadd.xlane.f32.xlu0 %v546
        %v549 = vpop.xlane.xlu0 %548
        %550 = vadd.xlane.f32.xlu0 %v547
        %v551 = vpop.xlane.xlu0 %550
        %v552 = vrcp.pop 128.0
        %v553 = vmul.f32 %v549, %v552
        %v554 = vmul.f32 %v551, %v552
        %v555 = vadd.f32 %v553, 1e-06
        %v556 = vadd.f32 %v554, 1e-06
        %v557 = vrsqrt.pop %v555
        %v558 = vrsqrt.pop %v556
        %v559 = vmul.f32 %v522, %v557
        %v560 = vmul.f32 %v523, %v558
        %v561 = vlaneseq
        %v562 = vshrl.u32 %v561, 7
        %v563 = vsub.s32 0, %v562
        %v564 = vrot.slane %v524, %v563
        %v565 = vmul.f32 %v559, %v564
        %v566 = vmul.f32 %v560, %v564
        %v567 = vld [vmem:[%s426] sm:$0xff]
        %v568 = vld [vmem:[%s426 + $0x8] sm:$0xff]
        %v569 = vld [vmem:[%s426 + $0x10] sm:$0xff]
        %v570 = vld [vmem:[%s426 + $0x18] sm:$0xff]
        %v571 = vld [vmem:[%s426 + $0x20] sm:$0xff]
        %v572 = vld [vmem:[%s426 + $0x28] sm:$0xff]
        %v573 = vld [vmem:[%s426 + $0x30] sm:$0xff]
        %v574 = vld [vmem:[%s426 + $0x38] sm:$0xff]
        %v575 = vld [vmem:[%s426 + $0x40] sm:$0xff]
        %v576 = vld [vmem:[%s426 + $0x48] sm:$0xff]
        %v577 = vld [vmem:[%s426 + $0x50] sm:$0xff]
        %v578 = vld [vmem:[%s426 + $0x58] sm:$0xff]
        %v579 = vld [vmem:[%s426 + $0x60] sm:$0xff]
        %v580 = vld [vmem:[%s426 + $0x68] sm:$0xff]
        %v581 = vld [vmem:[%s426 + $0x70] sm:$0xff]
        %v582 = vld [vmem:[%s426 + $0x78] sm:$0xff]
        %v583 = vld [vmem:[%s426 + $0x80] sm:$0xff]
        %v584 = vld [vmem:[%s426 + $0x88] sm:$0xff]
        %v585 = vld [vmem:[%s426 + $0x90] sm:$0xff]
        %v586 = vld [vmem:[%s426 + $0x98] sm:$0xff]
        %v587 = vld [vmem:[%s426 + $0xa0] sm:$0xff]
        %v588 = vld [vmem:[%s426 + $0xa8] sm:$0xff]
        %v589 = vld [vmem:[%s426 + $0xb0] sm:$0xff]
        %v590 = vld [vmem:[%s426 + $0xb8] sm:$0xff]
        %v591 = vld [vmem:[%s426 + $0xc0] sm:$0xff]
        %v592 = vld [vmem:[%s426 + $0xc8] sm:$0xff]
        %v593 = vld [vmem:[%s426 + $0xd0] sm:$0xff]
        %v594 = vld [vmem:[%s426 + $0xd8] sm:$0xff]
        %v595 = vld [vmem:[%s426 + $0xe0] sm:$0xff]
        %v596 = vld [vmem:[%s426 + $0xe8] sm:$0xff]
        %v597 = vld [vmem:[%s426 + $0xf0] sm:$0xff]
        %v598 = vld [vmem:[%s426 + $0xf8] sm:$0xff]
        %v599 = vld [vmem:[%s426 + $0x100] sm:$0xff]
        %v600 = vld [vmem:[%s426 + $0x108] sm:$0xff]
        %v601 = vld [vmem:[%s426 + $0x110] sm:$0xff]
        %v602 = vld [vmem:[%s426 + $0x118] sm:$0xff]
        %v603 = vld [vmem:[%s426 + $0x120] sm:$0xff]
        %v604 = vld [vmem:[%s426 + $0x128] sm:$0xff]
        %v605 = vld [vmem:[%s426 + $0x130] sm:$0xff]
        %v606 = vld [vmem:[%s426 + $0x138] sm:$0xff]
        %v607 = vld [vmem:[%s426 + $0x140] sm:$0xff]
        %v608 = vld [vmem:[%s426 + $0x148] sm:$0xff]
        %v609 = vld [vmem:[%s426 + $0x150] sm:$0xff]
        %v610 = vld [vmem:[%s426 + $0x158] sm:$0xff]
        %v611 = vld [vmem:[%s426 + $0x160] sm:$0xff]
        %v612 = vld [vmem:[%s426 + $0x168] sm:$0xff]
        %v613 = vld [vmem:[%s426 + $0x170] sm:$0xff]
        %v614 = vld [vmem:[%s426 + $0x178] sm:$0xff]
        %615 = vmatprep.subr.mxu0 %v613
        %616 = vmatpush1.msra.mxu0 %v612
        %617 = vmatprep.subr.mxu0 %v610
        %618 = vmatpush1.msra.mxu0 %v609
        %619 = vmatprep.subr.mxu0 %v607
        %620 = vmatpush1.msra.mxu0 %v606
        %621 = vmatprep.subr.mxu0 %v604
        %622 = vmatpush1.msra.mxu0 %v603
        %623 = vmatprep.subr.mxu0 %v601
        %624 = vmatpush1.msra.mxu0 %v600
        %625 = vmatprep.subr.mxu0 %v598
        %626 = vmatpush1.msra.mxu0 %v597
        %627 = vmatprep.subr.mxu0 %v595
        %628 = vmatpush1.msra.mxu0 %v594
        %629 = vmatprep.subr.mxu0 %v592
        %630 = vmatpush1.msra.mxu0 %v591
        %631 = vmatprep.subr.mxu0 %v589
        %632 = vmatpush1.msra.mxu0 %v588
        %633 = vmatprep.subr.mxu0 %v586
        %634 = vmatpush1.msra.mxu0 %v585
        %635 = vmatprep.subr.mxu0 %v583
        %636 = vmatpush1.msra.mxu0 %v582
        %637 = vmatprep.subr.mxu0 %v580
        %638 = vmatpush1.msra.mxu0 %v579
        %639 = vmatprep.subr.mxu0 %v577
        %640 = vmatpush1.msra.mxu0 %v576
        %641 = vmatprep.subr.mxu0 %v574
        %642 = vmatpush1.msra.mxu0 %v573
        %643 = vmatprep.subr.mxu0 %v571
        %644 = vmatpush1.msra.mxu0 %v570
        %645 = vmatprep.subr.mxu0 %v568
        %646 = vmatpush1.msra.mxu0 %v567
        %647 = vmatprep.subr.mxu0 0.0
        %648 = vmatpush2.msra.mxu0 0.0
        %649 = vmatprep.subr.mxu0 0.0
        %650 = vmatpush2.msra.mxu0 0.0
        %651 = vmatprep.subr.mxu0 0.0
        %652 = vmatpush2.msra.mxu0 0.0
        %653 = vmatprep.subr.mxu0 0.0
        %654 = vmatpush2.msra.mxu0 0.0
        %655 = vmatprep.subr.mxu0 0.0
        %656 = vmatpush2.msra.mxu0 0.0
        %657 = vmatprep.subr.mxu0 0.0
        %658 = vmatpush2.msra.mxu0 0.0
        %659 = vmatprep.subr.mxu0 0.0
        %660 = vmatpush2.msra.mxu0 0.0
        %661 = vmatprep.subr.mxu0 0.0
        %662 = vmatpush2.msra.mxu0 0.0
        %663 = vmatprep.subr.mxu0 0.0
        %664 = vmatpush2.msra.mxu0 0.0
        %665 = vmatprep.subr.mxu0 0.0
        %666 = vmatpush2.msra.mxu0 0.0
        %667 = vmatprep.subr.mxu0 0.0
        %668 = vmatpush2.msra.mxu0 0.0
        %669 = vmatprep.subr.mxu0 0.0
        %670 = vmatpush2.msra.mxu0 0.0
        %671 = vmatprep.subr.mxu0 0.0
        %672 = vmatpush2.msra.mxu0 0.0
        %673 = vmatprep.subr.mxu0 0.0
        %674 = vmatpush2.msra.mxu0 0.0
        %675 = vmatprep.subr.mxu0 0.0
        %676 = vmatpush2.msra.mxu0 0.0
        %677 = vmatprep.subr.mxu0 0.0
        %678 = vmatpush2.msra.mxu0 0.0
        %679 = vmatprep.mubr.f32.mxu0 0.0
        %680 = vmatmul.mubr.f32.gmra.mxu0 %v565
        %v681 = vpop.f32.mrf.mxu0
        %v682 = vadd.f32 0.0, %v681
        %v683 = vpop.f32.mrf.mxu0
        %v684 = vadd.f32 0.0, %v683
        %685 = vmatprep.mubr.f32.mxu0 0.0
        %686 = vmatmul.mubr.f32.gmra.mxu0 %v566
        %v687 = vpop.f32.mrf.mxu0
        %v688 = vadd.f32 0.0, %v687
        %v689 = vpop.f32.mrf.mxu0
        %v690 = vadd.f32 0.0, %v689
        %691 = vdwg.mxu0
        %692 = vmatprep.subr.mxu0 0.0
        %693 = vmatpush1.msra.mxu0 %v614
        %694 = vmatprep.subr.mxu0 0.0
        %695 = vmatpush1.msra.mxu0 %v611
        %696 = vmatprep.subr.mxu0 0.0
        %697 = vmatpush1.msra.mxu0 %v608
        %698 = vmatprep.subr.mxu0 0.0
        %699 = vmatpush1.msra.mxu0 %v605
        %700 = vmatprep.subr.mxu0 0.0
        %701 = vmatpush1.msra.mxu0 %v602
        %702 = vmatprep.subr.mxu0 0.0
        %703 = vmatpush1.msra.mxu0 %v599
        %704 = vmatprep.subr.mxu0 0.0
        %705 = vmatpush1.msra.mxu0 %v596
        %706 = vmatprep.subr.mxu0 0.0
        %707 = vmatpush1.msra.mxu0 %v593
        %708 = vmatprep.subr.mxu0 0.0
        %709 = vmatpush1.msra.mxu0 %v590
        %710 = vmatprep.subr.mxu0 0.0
        %711 = vmatpush1.msra.mxu0 %v587
        %712 = vmatprep.subr.mxu0 0.0
        %713 = vmatpush1.msra.mxu0 %v584
        %714 = vmatprep.subr.mxu0 0.0
        %715 = vmatpush1.msra.mxu0 %v581
        %716 = vmatprep.subr.mxu0 0.0
        %717 = vmatpush1.msra.mxu0 %v578
        %718 = vmatprep.subr.mxu0 0.0
        %719 = vmatpush1.msra.mxu0 %v575
        %720 = vmatprep.subr.mxu0 0.0
        %721 = vmatpush1.msra.mxu0 %v572
        %722 = vmatprep.subr.mxu0 0.0
        %723 = vmatpush1.msra.mxu0 %v569
        %724 = vmatprep.subr.mxu0 0.0
        %725 = vmatpush2.msra.mxu0 0.0
        %726 = vmatprep.subr.mxu0 0.0
        %727 = vmatpush2.msra.mxu0 0.0
        %728 = vmatprep.subr.mxu0 0.0
        %729 = vmatpush2.msra.mxu0 0.0
        %730 = vmatprep.subr.mxu0 0.0
        %731 = vmatpush2.msra.mxu0 0.0
        %732 = vmatprep.subr.mxu0 0.0
        %733 = vmatpush2.msra.mxu0 0.0
        %734 = vmatprep.subr.mxu0 0.0
        %735 = vmatpush2.msra.mxu0 0.0
        %736 = vmatprep.subr.mxu0 0.0
        %737 = vmatpush2.msra.mxu0 0.0
        %738 = vmatprep.subr.mxu0 0.0
        %739 = vmatpush2.msra.mxu0 0.0
        %740 = vmatprep.subr.mxu0 0.0
        %741 = vmatpush2.msra.mxu0 0.0
        %742 = vmatprep.subr.mxu0 0.0
        %743 = vmatpush2.msra.mxu0 0.0
        %744 = vmatprep.subr.mxu0 0.0
        %745 = vmatpush2.msra.mxu0 0.0
        %746 = vmatprep.subr.mxu0 0.0
        %747 = vmatpush2.msra.mxu0 0.0
        %748 = vmatprep.subr.mxu0 0.0
        %749 = vmatpush2.msra.mxu0 0.0
        %750 = vmatprep.subr.mxu0 0.0
        %751 = vmatpush2.msra.mxu0 0.0
        %752 = vmatprep.subr.mxu0 0.0
        %753 = vmatpush2.msra.mxu0 0.0
        %754 = vmatprep.subr.mxu0 0.0
        %755 = vmatpush2.msra.mxu0 0.0
        %756 = vmatprep.mubr.f32.mxu0 0.0
        %757 = vmatmul.mubr.f32.gmra.mxu0 %v565
        %v758 = vpop.f32.mrf.mxu0
        %v759 = vadd.f32 0.0, %v758
        %v760 = vpop.f32.mrf.mxu0
        %761 = vmatprep.mubr.f32.mxu0 0.0
        %762 = vmatmul.mubr.f32.gmra.mxu0 %v566
        %v763 = vpop.f32.mrf.mxu0
        %v764 = vadd.f32 0.0, %v763
        %v765 = vpop.f32.mrf.mxu0
        %766 = vdwg.mxu0
        %767 = vrot.lane.b32.xlu0 %v682, 127
        %v768 = vpop.permute.xlu0 %767
        %769 = vrot.lane.b32.xlu0 %v688, 127
        %v770 = vpop.permute.xlu0 %769
        %771 = vrot.lane.b32.xlu0 %v682, 1
        %v772 = vpop.permute.xlu0 %771
        %773 = vrot.lane.b32.xlu0 %v688, 1
        %v774 = vpop.permute.xlu0 %773
        %v775 = vsel %vm545, %v768, %v772
        %v776 = vsel %vm545, %v770, %v774
        %v777 = vmul.f32 %v682, %v525
        %v778 = vmul.f32 %v688, %v526
        %v779 = vmul.f32 %v775, %v527
        %v780 = vmul.f32 %v776, %v528
        %v781 = vadd.f32 %v777, %v779
        %v782 = vadd.f32 %v778, %v780
        %v783 = vmul.f32 %v781, 0.17677669
        %v784 = vmul.f32 %v782, 0.17677669
        %785 = vrot.lane.b32.xlu0 %v684, 127
        %v786 = vpop.permute.xlu0 %785
        %787 = vrot.lane.b32.xlu0 %v690, 127
        %v788 = vpop.permute.xlu0 %787
        %789 = vrot.lane.b32.xlu0 %v684, 1
        %v790 = vpop.permute.xlu0 %789
        %791 = vrot.lane.b32.xlu0 %v690, 1
        %v792 = vpop.permute.xlu0 %791
        %v793 = vsel %vm545, %v786, %v790
        %v794 = vsel %vm545, %v788, %v792
        %v795 = vmul.f32 %v684, %v525
        %v796 = vmul.f32 %v690, %v526
        %v797 = vmul.f32 %v793, %v527
        %v798 = vmul.f32 %v794, %v528
        %v799 = vadd.f32 %v795, %v797
        %v800 = vadd.f32 %v796, %v798
        %vm801 = vcmask 261120
        %v803 = vsel %vm801, %v783, 0
        %v806 = vsel %vm801, %v784, 0
        %v809 = vsel %vm801, %v799, 0
        %v812 = vsel %vm801, %v800, 0
        %814 = vmatprep.subr.mxu0 0.0
        %815 = vmatpush1.xpose.msra.mxu0 0.0
        %816 = vmatprep.subr.mxu0 0.0
        %817 = vmatpush1.xpose.msra.mxu0 0.0
        %818 = vmatprep.subr.mxu0 0.0
        %819 = vmatpush1.xpose.msra.mxu0 0.0
        %820 = vmatprep.subr.mxu0 0.0
        %821 = vmatpush1.xpose.msra.mxu0 0.0
        %822 = vmatprep.subr.mxu0 0.0
        %823 = vmatpush1.xpose.msra.mxu0 0.0
        %824 = vmatprep.subr.mxu0 0.0
        %825 = vmatpush1.xpose.msra.mxu0 0.0
        %826 = vmatprep.subr.mxu0 0.0
        %827 = vmatpush1.xpose.msra.mxu0 0.0
        %828 = vmatprep.subr.mxu0 0.0
        %829 = vmatpush1.xpose.msra.mxu0 0.0
        %830 = vmatprep.subr.mxu0 0.0
        %831 = vmatpush1.xpose.msra.mxu0 0.0
        %832 = vmatprep.subr.mxu0 0.0
        %833 = vmatpush1.xpose.msra.mxu0 0.0
        %834 = vmatprep.subr.mxu0 0.0
        %835 = vmatpush1.xpose.msra.mxu0 0.0
        %836 = vmatprep.subr.mxu0 0.0
        %837 = vmatpush1.xpose.msra.mxu0 0.0
        %838 = vmatprep.subr.mxu0 0.0
        %839 = vmatpush1.xpose.msra.mxu0 0.0
        %840 = vmatprep.subr.mxu0 0.0
        %841 = vmatpush1.xpose.msra.mxu0 0.0
        %842 = vmatprep.subr.mxu0 0.0
        %843 = vmatpush1.xpose.msra.mxu0 %v812
        %844 = vmatprep.subr.mxu0 0.0
        %845 = vmatpush1.xpose.msra.mxu0 %v809
        %846 = vmatprep.subr.mxu0 0.0
        %847 = vmatpush2.xpose.msra.mxu0 0.0
        %848 = vmatprep.subr.mxu0 0.0
        %849 = vmatpush2.xpose.msra.mxu0 0.0
        %850 = vmatprep.subr.mxu0 0.0
        %851 = vmatpush2.xpose.msra.mxu0 0.0
        %852 = vmatprep.subr.mxu0 0.0
        %853 = vmatpush2.xpose.msra.mxu0 0.0
        %854 = vmatprep.subr.mxu0 0.0
        %855 = vmatpush2.xpose.msra.mxu0 0.0
        %856 = vmatprep.subr.mxu0 0.0
        %857 = vmatpush2.xpose.msra.mxu0 0.0
        %858 = vmatprep.subr.mxu0 0.0
        %859 = vmatpush2.xpose.msra.mxu0 0.0
        %860 = vmatprep.subr.mxu0 0.0
        %861 = vmatpush2.xpose.msra.mxu0 0.0
        %862 = vmatprep.subr.mxu0 0.0
        %863 = vmatpush2.xpose.msra.mxu0 0.0
        %864 = vmatprep.subr.mxu0 0.0
        %865 = vmatpush2.xpose.msra.mxu0 0.0
        %866 = vmatprep.subr.mxu0 0.0
        %867 = vmatpush2.xpose.msra.mxu0 0.0
        %868 = vmatprep.subr.mxu0 0.0
        %869 = vmatpush2.xpose.msra.mxu0 0.0
        %870 = vmatprep.subr.mxu0 0.0
        %871 = vmatpush2.xpose.msra.mxu0 0.0
        %872 = vmatprep.subr.mxu0 0.0
        %873 = vmatpush2.xpose.msra.mxu0 0.0
        %874 = vmatprep.subr.mxu0 0.0
        %875 = vmatpush2.xpose.msra.mxu0 0.0
        %876 = vmatprep.subr.mxu0 0.0
        %877 = vmatpush2.xpose.msra.mxu0 0.0
        %878 = vmatprep.mubr.f32.mxu0 0.0
        %879 = vmatmul.mubr.f32.gmra.mxu0 %v803
        %v880 = vpop.f32.mrf.mxu0
        %v881 = vadd.f32 %v529, %v880
        %v882 = vpop.f32.mrf.mxu0
        %883 = vmatprep.mubr.f32.mxu0 0.0
        %884 = vmatmul.mubr.f32.gmra.mxu0 %v806
        %v885 = vpop.f32.mrf.mxu0
        %v886 = vadd.f32 %v530, %v885
        %v887 = vpop.f32.mrf.mxu0
        %888 = vdwg.mxu0
        %vm889 = vcmask 130048
        %v890 = vsel %vm889, %v881, -inf
        %891 = vmax.xlane.f32.xlu0 %v890
        %v892 = vpop.xlane.xlu0 %891
        %v893 = vsel %vm889, %v886, -inf
        %894 = vmax.xlane.f32.xlu0 %v893
        %v895 = vpop.xlane.xlu0 %894
        %v896 = vsub.f32 %v881, %v892
        %v897 = vsub.f32 %v886, %v895
        %v898 = vmul.f32 %v896, 1.442695
        %v899 = vpow.pop %v898
        %v900 = vmul.f32 %v897, 1.442695
        %v901 = vpow.pop %v900
        %v902 = vsel %vm889, %v899, 0.0
        %903 = vadd.xlane.f32.xlu0 %v902
        %v904 = vpop.xlane.xlu0 %903
        %v905 = vsel %vm889, %v901, 0.0
        %906 = vadd.xlane.f32.xlu0 %v905
        %v907 = vpop.xlane.xlu0 %906
        %v908 = vrcp.pop %v904
        %v909 = vrcp.pop %v907
        %v910 = vmul.f32 %v899, %v908
        %v911 = vmul.f32 %v901, %v909
        %v913 = vsel %vm889, %v910, 0
        %v916 = vsel %vm889, %v911, 0
        %918 = vmatprep.subr.mxu0 0.0
        %919 = vmatpush1.msra.mxu0 0.0
        %920 = vmatprep.subr.mxu0 0.0
        %921 = vmatpush1.msra.mxu0 0.0
        %922 = vmatprep.subr.mxu0 0.0
        %923 = vmatpush1.msra.mxu0 0.0
        %924 = vmatprep.subr.mxu0 0.0
        %925 = vmatpush1.msra.mxu0 0.0
        %926 = vmatprep.subr.mxu0 0.0
        %927 = vmatpush1.msra.mxu0 0.0
        %928 = vmatprep.subr.mxu0 0.0
        %929 = vmatpush1.msra.mxu0 0.0
        %930 = vmatprep.subr.mxu0 0.0
        %931 = vmatpush1.msra.mxu0 0.0
        %932 = vmatprep.subr.mxu0 0.0
        %933 = vmatpush1.msra.mxu0 0.0
        %934 = vmatprep.subr.mxu0 0.0
        %935 = vmatpush1.msra.mxu0 0.0
        %936 = vmatprep.subr.mxu0 0.0
        %937 = vmatpush1.msra.mxu0 0.0
        %938 = vmatprep.subr.mxu0 0.0
        %939 = vmatpush1.msra.mxu0 0.0
        %940 = vmatprep.subr.mxu0 0.0
        %941 = vmatpush1.msra.mxu0 0.0
        %942 = vmatprep.subr.mxu0 0.0
        %943 = vmatpush1.msra.mxu0 0.0
        %944 = vmatprep.subr.mxu0 0.0
        %945 = vmatpush1.msra.mxu0 0.0
        %946 = vmatprep.subr.mxu0 0.0
        %947 = vmatpush1.msra.mxu0 %v764
        %948 = vmatprep.subr.mxu0 0.0
        %949 = vmatpush1.msra.mxu0 %v759
        %950 = vmatprep.subr.mxu0 0.0
        %951 = vmatpush2.msra.mxu0 0.0
        %952 = vmatprep.subr.mxu0 0.0
        %953 = vmatpush2.msra.mxu0 0.0
        %954 = vmatprep.subr.mxu0 0.0
        %955 = vmatpush2.msra.mxu0 0.0
        %956 = vmatprep.subr.mxu0 0.0
        %957 = vmatpush2.msra.mxu0 0.0
        %958 = vmatprep.subr.mxu0 0.0
        %959 = vmatpush2.msra.mxu0 0.0
        %960 = vmatprep.subr.mxu0 0.0
        %961 = vmatpush2.msra.mxu0 0.0
        %962 = vmatprep.subr.mxu0 0.0
        %963 = vmatpush2.msra.mxu0 0.0
        %964 = vmatprep.subr.mxu0 0.0
        %965 = vmatpush2.msra.mxu0 0.0
        %966 = vmatprep.subr.mxu0 0.0
        %967 = vmatpush2.msra.mxu0 0.0
        %968 = vmatprep.subr.mxu0 0.0
        %969 = vmatpush2.msra.mxu0 0.0
        %970 = vmatprep.subr.mxu0 0.0
        %971 = vmatpush2.msra.mxu0 0.0
        %972 = vmatprep.subr.mxu0 0.0
        %973 = vmatpush2.msra.mxu0 0.0
        %974 = vmatprep.subr.mxu0 0.0
        %975 = vmatpush2.msra.mxu0 0.0
        %976 = vmatprep.subr.mxu0 0.0
        %977 = vmatpush2.msra.mxu0 0.0
        %978 = vmatprep.subr.mxu0 0.0
        %979 = vmatpush2.msra.mxu0 0.0
        %980 = vmatprep.subr.mxu0 0.0
        %981 = vmatpush2.msra.mxu0 0.0
        %982 = vmatprep.mubr.f32.mxu0 0.0
        %983 = vmatmul.mubr.f32.gmra.mxu0 %v913
        %v984 = vpop.f32.mrf.mxu0
        %v985 = vadd.f32 0.0, %v984
        %v986 = vpop.f32.mrf.mxu0
        %987 = vmatprep.mubr.f32.mxu0 0.0
        %988 = vmatmul.mubr.f32.gmra.mxu0 %v916
        %v989 = vpop.f32.mrf.mxu0
        %v990 = vadd.f32 0.0, %v989
        %v991 = vpop.f32.mrf.mxu0
        %992 = vdwg.mxu0
        %993 = vst.msk [vmem:[#allocation3] sm:$0xff] %vm801, %v985
        %994 = vst.msk [vmem:[#allocation3 + $0x8] sm:$0xff] %vm801, %v990
        %995 = vrot.lane.b32.xlu0 %v783, 96
        %v996 = vpop.permute.xlu0 %995
        %997 = vrot.lane.b32.xlu0 %v784, 96
        %v998 = vpop.permute.xlu0 %997
        %999 = vrot.lane.b32.xlu0 %v799, 96
        %v1000 = vpop.permute.xlu0 %999
        %1001 = vrot.lane.b32.xlu0 %v800, 96
        %v1002 = vpop.permute.xlu0 %1001
        %v1003 = vsel %vm801, %v996, 0
        %v1005 = vsel %vm801, %v998, 0
        %v1007 = vsel %vm801, %v1000, 0
        %v1009 = vsel %vm801, %v1002, 0
        %1011 = vmatprep.subr.mxu0 0.0
        %1012 = vmatpush1.xpose.msra.mxu0 0.0
        %1013 = vmatprep.subr.mxu0 0.0
        %1014 = vmatpush1.xpose.msra.mxu0 0.0
        %1015 = vmatprep.subr.mxu0 0.0
        %1016 = vmatpush1.xpose.msra.mxu0 0.0
        %1017 = vmatprep.subr.mxu0 0.0
        %1018 = vmatpush1.xpose.msra.mxu0 0.0
        %1019 = vmatprep.subr.mxu0 0.0
        %1020 = vmatpush1.xpose.msra.mxu0 0.0
        %1021 = vmatprep.subr.mxu0 0.0
        %1022 = vmatpush1.xpose.msra.mxu0 0.0
        %1023 = vmatprep.subr.mxu0 0.0
        %1024 = vmatpush1.xpose.msra.mxu0 0.0
        %1025 = vmatprep.subr.mxu0 0.0
        %1026 = vmatpush1.xpose.msra.mxu0 0.0
        %1027 = vmatprep.subr.mxu0 0.0
        %1028 = vmatpush1.xpose.msra.mxu0 0.0
        %1029 = vmatprep.subr.mxu0 0.0
        %1030 = vmatpush1.xpose.msra.mxu0 0.0
        %1031 = vmatprep.subr.mxu0 0.0
        %1032 = vmatpush1.xpose.msra.mxu0 0.0
        %1033 = vmatprep.subr.mxu0 0.0
        %1034 = vmatpush1.xpose.msra.mxu0 0.0
        %1035 = vmatprep.subr.mxu0 0.0
        %1036 = vmatpush1.xpose.msra.mxu0 0.0
        %1037 = vmatprep.subr.mxu0 0.0
        %1038 = vmatpush1.xpose.msra.mxu0 0.0
        %1039 = vmatprep.subr.mxu0 0.0
        %1040 = vmatpush1.xpose.msra.mxu0 %v1009
        %1041 = vmatprep.subr.mxu0 0.0
        %1042 = vmatpush1.xpose.msra.mxu0 %v1007
        %1043 = vmatprep.subr.mxu0 0.0
        %1044 = vmatpush2.xpose.msra.mxu0 0.0
        %1045 = vmatprep.subr.mxu0 0.0
        %1046 = vmatpush2.xpose.msra.mxu0 0.0
        %1047 = vmatprep.subr.mxu0 0.0
        %1048 = vmatpush2.xpose.msra.mxu0 0.0
        %1049 = vmatprep.subr.mxu0 0.0
        %1050 = vmatpush2.xpose.msra.mxu0 0.0
        %1051 = vmatprep.subr.mxu0 0.0
        %1052 = vmatpush2.xpose.msra.mxu0 0.0
        %1053 = vmatprep.subr.mxu0 0.0
        %1054 = vmatpush2.xpose.msra.mxu0 0.0
        %1055 = vmatprep.subr.mxu0 0.0
        %1056 = vmatpush2.xpose.msra.mxu0 0.0
        %1057 = vmatprep.subr.mxu0 0.0
        %1058 = vmatpush2.xpose.msra.mxu0 0.0
        %1059 = vmatprep.subr.mxu0 0.0
        %1060 = vmatpush2.xpose.msra.mxu0 0.0
        %1061 = vmatprep.subr.mxu0 0.0
        %1062 = vmatpush2.xpose.msra.mxu0 0.0
        %1063 = vmatprep.subr.mxu0 0.0
        %1064 = vmatpush2.xpose.msra.mxu0 0.0
        %1065 = vmatprep.subr.mxu0 0.0
        %1066 = vmatpush2.xpose.msra.mxu0 0.0
        %1067 = vmatprep.subr.mxu0 0.0
        %1068 = vmatpush2.xpose.msra.mxu0 0.0
        %1069 = vmatprep.subr.mxu0 0.0
        %1070 = vmatpush2.xpose.msra.mxu0 0.0
        %1071 = vmatprep.subr.mxu0 0.0
        %1072 = vmatpush2.xpose.msra.mxu0 0.0
        %1073 = vmatprep.subr.mxu0 0.0
        %1074 = vmatpush2.xpose.msra.mxu0 0.0
        %1075 = vmatprep.mubr.f32.mxu0 0.0
        %1076 = vmatmul.mubr.f32.gmra.mxu0 %v1003
        %v1077 = vpop.f32.mrf.mxu0
        %v1078 = vadd.f32 %v529, %v1077
        %v1079 = vpop.f32.mrf.mxu0
        %1080 = vmatprep.mubr.f32.mxu0 0.0
        %1081 = vmatmul.mubr.f32.gmra.mxu0 %v1005
        %v1082 = vpop.f32.mrf.mxu0
        %v1083 = vadd.f32 %v530, %v1082
        %v1084 = vpop.f32.mrf.mxu0
        %1085 = vdwg.mxu0
        %v1086 = vsel %vm889, %v1078, -inf
        %1087 = vmax.xlane.f32.xlu0 %v1086
        %v1088 = vpop.xlane.xlu0 %1087
        %v1089 = vsel %vm889, %v1083, -inf
        %1090 = vmax.xlane.f32.xlu0 %v1089
        %v1091 = vpop.xlane.xlu0 %1090
        %v1092 = vsub.f32 %v1078, %v1088
        %v1093 = vsub.f32 %v1083, %v1091
        %v1094 = vmul.f32 %v1092, 1.442695
        %v1095 = vpow.pop %v1094
        %v1096 = vmul.f32 %v1093, 1.442695
        %v1097 = vpow.pop %v1096
        %v1098 = vsel %vm889, %v1095, 0.0
        %1099 = vadd.xlane.f32.xlu0 %v1098
        %v1100 = vpop.xlane.xlu0 %1099
        %v1101 = vsel %vm889, %v1097, 0.0
        %1102 = vadd.xlane.f32.xlu0 %v1101
        %v1103 = vpop.xlane.xlu0 %1102
        %v1104 = vrcp.pop %v1100
        %v1105 = vrcp.pop %v1103
        %v1106 = vmul.f32 %v1095, %v1104
        %v1107 = vmul.f32 %v1097, %v1105
        %1110 = vrot.lane.b32.xlu0 %v759, 96
        %v1111 = vpop.permute.xlu0 %1110
        %1112 = vrot.lane.b32.xlu0 %v764, 96
        %v1113 = vpop.permute.xlu0 %1112
        %v1117 = vsel %vm889, %v1106, 0
        %v1120 = vsel %vm889, %v1107, 0
        %1122 = vmatprep.subr.mxu0 0.0
        %1123 = vmatpush1.msra.mxu0 0.0
        %1124 = vmatprep.subr.mxu0 0.0
        %1125 = vmatpush1.msra.mxu0 0.0
        %1126 = vmatprep.subr.mxu0 0.0
        %1127 = vmatpush1.msra.mxu0 0.0
        %1128 = vmatprep.subr.mxu0 0.0
        %1129 = vmatpush1.msra.mxu0 0.0
        %1130 = vmatprep.subr.mxu0 0.0
        %1131 = vmatpush1.msra.mxu0 0.0
        %1132 = vmatprep.subr.mxu0 0.0
        %1133 = vmatpush1.msra.mxu0 0.0
        %1134 = vmatprep.subr.mxu0 0.0
        %1135 = vmatpush1.msra.mxu0 0.0
        %1136 = vmatprep.subr.mxu0 0.0
        %1137 = vmatpush1.msra.mxu0 0.0
        %1138 = vmatprep.subr.mxu0 0.0
        %1139 = vmatpush1.msra.mxu0 0.0
        %1140 = vmatprep.subr.mxu0 0.0
        %1141 = vmatpush1.msra.mxu0 0.0
        %1142 = vmatprep.subr.mxu0 0.0
        %1143 = vmatpush1.msra.mxu0 0.0
        %1144 = vmatprep.subr.mxu0 0.0
        %1145 = vmatpush1.msra.mxu0 0.0
        %1146 = vmatprep.subr.mxu0 0.0
        %1147 = vmatpush1.msra.mxu0 0.0
        %1148 = vmatprep.subr.mxu0 0.0
        %1149 = vmatpush1.msra.mxu0 0.0
        %1150 = vmatprep.subr.mxu0 0.0
        %1151 = vmatpush1.msra.mxu0 %v1113
        %1152 = vmatprep.subr.mxu0 0.0
        %1153 = vmatpush1.msra.mxu0 %v1111
        %1154 = vmatprep.subr.mxu0 0.0
        %1155 = vmatpush2.msra.mxu0 0.0
        %1156 = vmatprep.subr.mxu0 0.0
        %1157 = vmatpush2.msra.mxu0 0.0
        %1158 = vmatprep.subr.mxu0 0.0
        %1159 = vmatpush2.msra.mxu0 0.0
        %1160 = vmatprep.subr.mxu0 0.0
        %1161 = vmatpush2.msra.mxu0 0.0
        %1162 = vmatprep.subr.mxu0 0.0
        %1163 = vmatpush2.msra.mxu0 0.0
        %1164 = vmatprep.subr.mxu0 0.0
        %1165 = vmatpush2.msra.mxu0 0.0
        %1166 = vmatprep.subr.mxu0 0.0
        %1167 = vmatpush2.msra.mxu0 0.0
        %1168 = vmatprep.subr.mxu0 0.0
        %1169 = vmatpush2.msra.mxu0 0.0
        %1170 = vmatprep.subr.mxu0 0.0
        %1171 = vmatpush2.msra.mxu0 0.0
        %1172 = vmatprep.subr.mxu0 0.0
        %1173 = vmatpush2.msra.mxu0 0.0
        %1174 = vmatprep.subr.mxu0 0.0
        %1175 = vmatpush2.msra.mxu0 0.0
        %1176 = vmatprep.subr.mxu0 0.0
        %1177 = vmatpush2.msra.mxu0 0.0
        %1178 = vmatprep.subr.mxu0 0.0
        %1179 = vmatpush2.msra.mxu0 0.0
        %1180 = vmatprep.subr.mxu0 0.0
        %1181 = vmatpush2.msra.mxu0 0.0
        %1182 = vmatprep.subr.mxu0 0.0
        %1183 = vmatpush2.msra.mxu0 0.0
        %1184 = vmatprep.subr.mxu0 0.0
        %1185 = vmatpush2.msra.mxu0 0.0
        %1186 = vmatprep.mubr.f32.mxu0 0.0
        %1187 = vmatmul.mubr.f32.gmra.mxu0 %v1117
        %v1188 = vpop.f32.mrf.mxu0
        %v1189 = vadd.f32 0.0, %v1188
        %v1190 = vpop.f32.mrf.mxu0
        %1191 = vmatprep.mubr.f32.mxu0 0.0
        %1192 = vmatmul.mubr.f32.gmra.mxu0 %v1120
        %v1193 = vpop.f32.mrf.mxu0
        %v1194 = vadd.f32 0.0, %v1193
        %v1195 = vpop.f32.mrf.mxu0
        %1196 = vdwg.mxu0
        %1199 = vrot.lane.b32.xlu0 %v1189, 32
        %v1200 = vpop.permute.xlu0 %1199
        %1201 = vrot.lane.b32.xlu0 %v1194, 32
        %v1202 = vpop.permute.xlu0 %1201
        %vm1205 = vcmask 523520
        %1206 = vst.msk [vmem:[#allocation3] sm:$0xff] %vm1205, %v1200
        %1207 = vst.msk [vmem:[#allocation3 + $0x8] sm:$0xff] %vm1205, %v1202
        %1208 = vrot.lane.b32.xlu0 %v783, 64
        %v1209 = vpop.permute.xlu0 %1208
        %1210 = vrot.lane.b32.xlu0 %v784, 64
        %v1211 = vpop.permute.xlu0 %1210
        %1212 = vrot.lane.b32.xlu0 %v799, 64
        %v1213 = vpop.permute.xlu0 %1212
        %1214 = vrot.lane.b32.xlu0 %v800, 64
        %v1215 = vpop.permute.xlu0 %1214
        %v1216 = vsel %vm801, %v1209, 0
        %v1218 = vsel %vm801, %v1211, 0
        %v1220 = vsel %vm801, %v1213, 0
        %v1222 = vsel %vm801, %v1215, 0
        %1224 = vmatprep.subr.mxu0 0.0
        %1225 = vmatpush1.xpose.msra.mxu0 0.0
        %1226 = vmatprep.subr.mxu0 0.0
        %1227 = vmatpush1.xpose.msra.mxu0 0.0
        %1228 = vmatprep.subr.mxu0 0.0
        %1229 = vmatpush1.xpose.msra.mxu0 0.0
        %1230 = vmatprep.subr.mxu0 0.0
        %1231 = vmatpush1.xpose.msra.mxu0 0.0
        %1232 = vmatprep.subr.mxu0 0.0
        %1233 = vmatpush1.xpose.msra.mxu0 0.0
        %1234 = vmatprep.subr.mxu0 0.0
        %1235 = vmatpush1.xpose.msra.mxu0 0.0
        %1236 = vmatprep.subr.mxu0 0.0
        %1237 = vmatpush1.xpose.msra.mxu0 0.0
        %1238 = vmatprep.subr.mxu0 0.0
        %1239 = vmatpush1.xpose.msra.mxu0 0.0
        %1240 = vmatprep.subr.mxu0 0.0
        %1241 = vmatpush1.xpose.msra.mxu0 0.0
        %1242 = vmatprep.subr.mxu0 0.0
        %1243 = vmatpush1.xpose.msra.mxu0 0.0
        %1244 = vmatprep.subr.mxu0 0.0
        %1245 = vmatpush1.xpose.msra.mxu0 0.0
        %1246 = vmatprep.subr.mxu0 0.0
        %1247 = vmatpush1.xpose.msra.mxu0 0.0
        %1248 = vmatprep.subr.mxu0 0.0
        %1249 = vmatpush1.xpose.msra.mxu0 0.0
        %1250 = vmatprep.subr.mxu0 0.0
        %1251 = vmatpush1.xpose.msra.mxu0 0.0
        %1252 = vmatprep.subr.mxu0 0.0
        %1253 = vmatpush1.xpose.msra.mxu0 %v1222
        %1254 = vmatprep.subr.mxu0 0.0
        %1255 = vmatpush1.xpose.msra.mxu0 %v1220
        %1256 = vmatprep.subr.mxu0 0.0
        %1257 = vmatpush2.xpose.msra.mxu0 0.0
        %1258 = vmatprep.subr.mxu0 0.0
        %1259 = vmatpush2.xpose.msra.mxu0 0.0
        %1260 = vmatprep.subr.mxu0 0.0
        %1261 = vmatpush2.xpose.msra.mxu0 0.0
        %1262 = vmatprep.subr.mxu0 0.0
        %1263 = vmatpush2.xpose.msra.mxu0 0.0
        %1264 = vmatprep.subr.mxu0 0.0
        %1265 = vmatpush2.xpose.msra.mxu0 0.0
        %1266 = vmatprep.subr.mxu0 0.0
        %1267 = vmatpush2.xpose.msra.mxu0 0.0
        %1268 = vmatprep.subr.mxu0 0.0
        %1269 = vmatpush2.xpose.msra.mxu0 0.0
        %1270 = vmatprep.subr.mxu0 0.0
        %1271 = vmatpush2.xpose.msra.mxu0 0.0
        %1272 = vmatprep.subr.mxu0 0.0
        %1273 = vmatpush2.xpose.msra.mxu0 0.0
        %1274 = vmatprep.subr.mxu0 0.0
        %1275 = vmatpush2.xpose.msra.mxu0 0.0
        %1276 = vmatprep.subr.mxu0 0.0
        %1277 = vmatpush2.xpose.msra.mxu0 0.0
        %1278 = vmatprep.subr.mxu0 0.0
        %1279 = vmatpush2.xpose.msra.mxu0 0.0
        %1280 = vmatprep.subr.mxu0 0.0
        %1281 = vmatpush2.xpose.msra.mxu0 0.0
        %1282 = vmatprep.subr.mxu0 0.0
        %1283 = vmatpush2.xpose.msra.mxu0 0.0
        %1284 = vmatprep.subr.mxu0 0.0
        %1285 = vmatpush2.xpose.msra.mxu0 0.0
        %1286 = vmatprep.subr.mxu0 0.0
        %1287 = vmatpush2.xpose.msra.mxu0 0.0
        %1288 = vmatprep.mubr.f32.mxu0 0.0
        %1289 = vmatmul.mubr.f32.gmra.mxu0 %v1216
        %v1290 = vpop.f32.mrf.mxu0
        %v1291 = vadd.f32 %v529, %v1290
        %v1292 = vpop.f32.mrf.mxu0
        %1293 = vmatprep.mubr.f32.mxu0 0.0
        %1294 = vmatmul.mubr.f32.gmra.mxu0 %v1218
        %v1295 = vpop.f32.mrf.mxu0
        %v1296 = vadd.f32 %v530, %v1295
        %v1297 = vpop.f32.mrf.mxu0
        %1298 = vdwg.mxu0
        %v1299 = vsel %vm889, %v1291, -inf
        %1300 = vmax.xlane.f32.xlu0 %v1299
        %v1301 = vpop.xlane.xlu0 %1300
        %v1302 = vsel %vm889, %v1296, -inf
        %1303 = vmax.xlane.f32.xlu0 %v1302
        %v1304 = vpop.xlane.xlu0 %1303
        %v1305 = vsub.f32 %v1291, %v1301
        %v1306 = vsub.f32 %v1296, %v1304
        %v1307 = vmul.f32 %v1305, 1.442695
        %v1308 = vpow.pop %v1307
        %v1309 = vmul.f32 %v1306, 1.442695
        %v1310 = vpow.pop %v1309
        %v1311 = vsel %vm889, %v1308, 0.0
        %1312 = vadd.xlane.f32.xlu0 %v1311
        %v1313 = vpop.xlane.xlu0 %1312
        %v1314 = vsel %vm889, %v1310, 0.0
        %1315 = vadd.xlane.f32.xlu0 %v1314
        %v1316 = vpop.xlane.xlu0 %1315
        %v1317 = vrcp.pop %v1313
        %v1318 = vrcp.pop %v1316
        %v1319 = vmul.f32 %v1308, %v1317
        %v1320 = vmul.f32 %v1310, %v1318
        %1321 = vrot.lane.b32.xlu0 %v759, 64
        %v1322 = vpop.permute.xlu0 %1321
        %1323 = vrot.lane.b32.xlu0 %v764, 64
        %v1324 = vpop.permute.xlu0 %1323
        %v1328 = vsel %vm889, %v1319, 0
        %v1331 = vsel %vm889, %v1320, 0
        %1333 = vmatprep.subr.mxu0 0.0
        %1334 = vmatpush1.msra.mxu0 0.0
        %1335 = vmatprep.subr.mxu0 0.0
        %1336 = vmatpush1.msra.mxu0 0.0
        %1337 = vmatprep.subr.mxu0 0.0
        %1338 = vmatpush1.msra.mxu0 0.0
        %1339 = vmatprep.subr.mxu0 0.0
        %1340 = vmatpush1.msra.mxu0 0.0
        %1341 = vmatprep.subr.mxu0 0.0
        %1342 = vmatpush1.msra.mxu0 0.0
        %1343 = vmatprep.subr.mxu0 0.0
        %1344 = vmatpush1.msra.mxu0 0.0
        %1345 = vmatprep.subr.mxu0 0.0
        %1346 = vmatpush1.msra.mxu0 0.0
        %1347 = vmatprep.subr.mxu0 0.0
        %1348 = vmatpush1.msra.mxu0 0.0
        %1349 = vmatprep.subr.mxu0 0.0
        %1350 = vmatpush1.msra.mxu0 0.0
        %1351 = vmatprep.subr.mxu0 0.0
        %1352 = vmatpush1.msra.mxu0 0.0
        %1353 = vmatprep.subr.mxu0 0.0
        %1354 = vmatpush1.msra.mxu0 0.0
        %1355 = vmatprep.subr.mxu0 0.0
        %1356 = vmatpush1.msra.mxu0 0.0
        %1357 = vmatprep.subr.mxu0 0.0
        %1358 = vmatpush1.msra.mxu0 0.0
        %1359 = vmatprep.subr.mxu0 0.0
        %1360 = vmatpush1.msra.mxu0 0.0
        %1361 = vmatprep.subr.mxu0 0.0
        %1362 = vmatpush1.msra.mxu0 %v1324
        %1363 = vmatprep.subr.mxu0 0.0
        %1364 = vmatpush1.msra.mxu0 %v1322
        %1365 = vmatprep.subr.mxu0 0.0
        %1366 = vmatpush2.msra.mxu0 0.0
        %1367 = vmatprep.subr.mxu0 0.0
        %1368 = vmatpush2.msra.mxu0 0.0
        %1369 = vmatprep.subr.mxu0 0.0
        %1370 = vmatpush2.msra.mxu0 0.0
        %1371 = vmatprep.subr.mxu0 0.0
        %1372 = vmatpush2.msra.mxu0 0.0
        %1373 = vmatprep.subr.mxu0 0.0
        %1374 = vmatpush2.msra.mxu0 0.0
        %1375 = vmatprep.subr.mxu0 0.0
        %1376 = vmatpush2.msra.mxu0 0.0
        %1377 = vmatprep.subr.mxu0 0.0
        %1378 = vmatpush2.msra.mxu0 0.0
        %1379 = vmatprep.subr.mxu0 0.0
        %1380 = vmatpush2.msra.mxu0 0.0
        %1381 = vmatprep.subr.mxu0 0.0
        %1382 = vmatpush2.msra.mxu0 0.0
        %1383 = vmatprep.subr.mxu0 0.0
        %1384 = vmatpush2.msra.mxu0 0.0
        %1385 = vmatprep.subr.mxu0 0.0
        %1386 = vmatpush2.msra.mxu0 0.0
        %1387 = vmatprep.subr.mxu0 0.0
        %1388 = vmatpush2.msra.mxu0 0.0
        %1389 = vmatprep.subr.mxu0 0.0
        %1390 = vmatpush2.msra.mxu0 0.0
        %1391 = vmatprep.subr.mxu0 0.0
        %1392 = vmatpush2.msra.mxu0 0.0
        %1393 = vmatprep.subr.mxu0 0.0
        %1394 = vmatpush2.msra.mxu0 0.0
        %1395 = vmatprep.subr.mxu0 0.0
        %1396 = vmatpush2.msra.mxu0 0.0
        %1397 = vmatprep.mubr.f32.mxu0 0.0
        %1398 = vmatmul.mubr.f32.gmra.mxu0 %v1328
        %v1399 = vpop.f32.mrf.mxu0
        %v1400 = vadd.f32 0.0, %v1399
        %v1401 = vpop.f32.mrf.mxu0
        %1402 = vmatprep.mubr.f32.mxu0 0.0
        %1403 = vmatmul.mubr.f32.gmra.mxu0 %v1331
        %v1404 = vpop.f32.mrf.mxu0
        %v1405 = vadd.f32 0.0, %v1404
        %v1406 = vpop.f32.mrf.mxu0
        %1407 = vdwg.mxu0
        %1410 = vrot.lane.b32.xlu0 %v1400, 64
        %v1411 = vpop.permute.xlu0 %1410
        %1412 = vrot.lane.b32.xlu0 %v1405, 64
        %v1413 = vpop.permute.xlu0 %1412
        %vm1416 = vcmask 785920
        %1417 = vst.msk [vmem:[#allocation3] sm:$0xff] %vm1416, %v1411
        %1418 = vst.msk [vmem:[#allocation3 + $0x8] sm:$0xff] %vm1416, %v1413
        %1419 = vrot.lane.b32.xlu0 %v783, 32
        %v1420 = vpop.permute.xlu0 %1419
        %1421 = vrot.lane.b32.xlu0 %v784, 32
        %v1422 = vpop.permute.xlu0 %1421
        %1423 = vrot.lane.b32.xlu0 %v799, 32
        %v1424 = vpop.permute.xlu0 %1423
        %1425 = vrot.lane.b32.xlu0 %v800, 32
        %v1426 = vpop.permute.xlu0 %1425
        %v1427 = vsel %vm801, %v1420, 0
        %v1429 = vsel %vm801, %v1422, 0
        %v1431 = vsel %vm801, %v1424, 0
        %v1433 = vsel %vm801, %v1426, 0
        %1435 = vmatprep.subr.mxu0 0.0
        %1436 = vmatpush1.xpose.msra.mxu0 0.0
        %1437 = vmatprep.subr.mxu0 0.0
        %1438 = vmatpush1.xpose.msra.mxu0 0.0
        %1439 = vmatprep.subr.mxu0 0.0
        %1440 = vmatpush1.xpose.msra.mxu0 0.0
        %1441 = vmatprep.subr.mxu0 0.0
        %1442 = vmatpush1.xpose.msra.mxu0 0.0
        %1443 = vmatprep.subr.mxu0 0.0
        %1444 = vmatpush1.xpose.msra.mxu0 0.0
        %1445 = vmatprep.subr.mxu0 0.0
        %1446 = vmatpush1.xpose.msra.mxu0 0.0
        %1447 = vmatprep.subr.mxu0 0.0
        %1448 = vmatpush1.xpose.msra.mxu0 0.0
        %1449 = vmatprep.subr.mxu0 0.0
        %1450 = vmatpush1.xpose.msra.mxu0 0.0
        %1451 = vmatprep.subr.mxu0 0.0
        %1452 = vmatpush1.xpose.msra.mxu0 0.0
        %1453 = vmatprep.subr.mxu0 0.0
        %1454 = vmatpush1.xpose.msra.mxu0 0.0
        %1455 = vmatprep.subr.mxu0 0.0
        %1456 = vmatpush1.xpose.msra.mxu0 0.0
        %1457 = vmatprep.subr.mxu0 0.0
        %1458 = vmatpush1.xpose.msra.mxu0 0.0
        %1459 = vmatprep.subr.mxu0 0.0
        %1460 = vmatpush1.xpose.msra.mxu0 0.0
        %1461 = vmatprep.subr.mxu0 0.0
        %1462 = vmatpush1.xpose.msra.mxu0 0.0
        %1463 = vmatprep.subr.mxu0 0.0
        %1464 = vmatpush1.xpose.msra.mxu0 %v1433
        %1465 = vmatprep.subr.mxu0 0.0
        %1466 = vmatpush1.xpose.msra.mxu0 %v1431
        %1467 = vmatprep.subr.mxu0 0.0
        %1468 = vmatpush2.xpose.msra.mxu0 0.0
        %1469 = vmatprep.subr.mxu0 0.0
        %1470 = vmatpush2.xpose.msra.mxu0 0.0
        %1471 = vmatprep.subr.mxu0 0.0
        %1472 = vmatpush2.xpose.msra.mxu0 0.0
        %1473 = vmatprep.subr.mxu0 0.0
        %1474 = vmatpush2.xpose.msra.mxu0 0.0
        %1475 = vmatprep.subr.mxu0 0.0
        %1476 = vmatpush2.xpose.msra.mxu0 0.0
        %1477 = vmatprep.subr.mxu0 0.0
        %1478 = vmatpush2.xpose.msra.mxu0 0.0
        %1479 = vmatprep.subr.mxu0 0.0
        %1480 = vmatpush2.xpose.msra.mxu0 0.0
        %1481 = vmatprep.subr.mxu0 0.0
        %1482 = vmatpush2.xpose.msra.mxu0 0.0
        %1483 = vmatprep.subr.mxu0 0.0
        %1484 = vmatpush2.xpose.msra.mxu0 0.0
        %1485 = vmatprep.subr.mxu0 0.0
        %1486 = vmatpush2.xpose.msra.mxu0 0.0
        %1487 = vmatprep.subr.mxu0 0.0
        %1488 = vmatpush2.xpose.msra.mxu0 0.0
        %1489 = vmatprep.subr.mxu0 0.0
        %1490 = vmatpush2.xpose.msra.mxu0 0.0
        %1491 = vmatprep.subr.mxu0 0.0
        %1492 = vmatpush2.xpose.msra.mxu0 0.0
        %1493 = vmatprep.subr.mxu0 0.0
        %1494 = vmatpush2.xpose.msra.mxu0 0.0
        %1495 = vmatprep.subr.mxu0 0.0
        %1496 = vmatpush2.xpose.msra.mxu0 0.0
        %1497 = vmatprep.subr.mxu0 0.0
        %1498 = vmatpush2.xpose.msra.mxu0 0.0
        %1499 = vmatprep.mubr.f32.mxu0 0.0
        %1500 = vmatmul.mubr.f32.gmra.mxu0 %v1427
        %v1501 = vpop.f32.mrf.mxu0
        %v1502 = vadd.f32 %v529, %v1501
        %v1503 = vpop.f32.mrf.mxu0
        %1504 = vmatprep.mubr.f32.mxu0 0.0
        %1505 = vmatmul.mubr.f32.gmra.mxu0 %v1429
        %v1506 = vpop.f32.mrf.mxu0
        %v1507 = vadd.f32 %v530, %v1506
        %v1508 = vpop.f32.mrf.mxu0
        %1509 = vdwg.mxu0
        %v1510 = vsel %vm889, %v1502, -inf
        %1511 = vmax.xlane.f32.xlu0 %v1510
        %v1512 = vpop.xlane.xlu0 %1511
        %v1513 = vsel %vm889, %v1507, -inf
        %1514 = vmax.xlane.f32.xlu0 %v1513
        %v1515 = vpop.xlane.xlu0 %1514
        %v1516 = vsub.f32 %v1502, %v1512
        %v1517 = vsub.f32 %v1507, %v1515
        %v1518 = vmul.f32 %v1516, 1.442695
        %v1519 = vpow.pop %v1518
        %v1520 = vmul.f32 %v1517, 1.442695
        %v1521 = vpow.pop %v1520
        %v1522 = vsel %vm889, %v1519, 0.0
        %1523 = vadd.xlane.f32.xlu0 %v1522
        %v1524 = vpop.xlane.xlu0 %1523
        %v1525 = vsel %vm889, %v1521, 0.0
        %1526 = vadd.xlane.f32.xlu0 %v1525
        %v1527 = vpop.xlane.xlu0 %1526
        %v1528 = vrcp.pop %v1524
        %v1529 = vrcp.pop %v1527
        %v1530 = vmul.f32 %v1519, %v1528
        %v1531 = vmul.f32 %v1521, %v1529
        %1532 = vrot.lane.b32.xlu0 %v759, 32
        %v1533 = vpop.permute.xlu0 %1532
        %1534 = vrot.lane.b32.xlu0 %v764, 32
        %v1535 = vpop.permute.xlu0 %1534
        %v1539 = vsel %vm889, %v1530, 0
        %v1542 = vsel %vm889, %v1531, 0
        %1544 = vmatprep.subr.mxu0 0.0
        %1545 = vmatpush1.msra.mxu0 0.0
        %1546 = vmatprep.subr.mxu0 0.0
        %1547 = vmatpush1.msra.mxu0 0.0
        %1548 = vmatprep.subr.mxu0 0.0
        %1549 = vmatpush1.msra.mxu0 0.0
        %1550 = vmatprep.subr.mxu0 0.0
        %1551 = vmatpush1.msra.mxu0 0.0
        %1552 = vmatprep.subr.mxu0 0.0
        %1553 = vmatpush1.msra.mxu0 0.0
        %1554 = vmatprep.subr.mxu0 0.0
        %1555 = vmatpush1.msra.mxu0 0.0
        %1556 = vmatprep.subr.mxu0 0.0
        %1557 = vmatpush1.msra.mxu0 0.0
        %1558 = vmatprep.subr.mxu0 0.0
        %1559 = vmatpush1.msra.mxu0 0.0
        %1560 = vmatprep.subr.mxu0 0.0
        %1561 = vmatpush1.msra.mxu0 0.0
        %1562 = vmatprep.subr.mxu0 0.0
        %1563 = vmatpush1.msra.mxu0 0.0
        %1564 = vmatprep.subr.mxu0 0.0
        %1565 = vmatpush1.msra.mxu0 0.0
        %1566 = vmatprep.subr.mxu0 0.0
        %1567 = vmatpush1.msra.mxu0 0.0
        %1568 = vmatprep.subr.mxu0 0.0
        %1569 = vmatpush1.msra.mxu0 0.0
        %1570 = vmatprep.subr.mxu0 0.0
        %1571 = vmatpush1.msra.mxu0 0.0
        %1572 = vmatprep.subr.mxu0 0.0
        %1573 = vmatpush1.msra.mxu0 %v1535
        %1574 = vmatprep.subr.mxu0 0.0
        %1575 = vmatpush1.msra.mxu0 %v1533
        %1576 = vmatprep.subr.mxu0 0.0
        %1577 = vmatpush2.msra.mxu0 0.0
        %1578 = vmatprep.subr.mxu0 0.0
        %1579 = vmatpush2.msra.mxu0 0.0
        %1580 = vmatprep.subr.mxu0 0.0
        %1581 = vmatpush2.msra.mxu0 0.0
        %1582 = vmatprep.subr.mxu0 0.0
        %1583 = vmatpush2.msra.mxu0 0.0
        %1584 = vmatprep.subr.mxu0 0.0
        %1585 = vmatpush2.msra.mxu0 0.0
        %1586 = vmatprep.subr.mxu0 0.0
        %1587 = vmatpush2.msra.mxu0 0.0
        %1588 = vmatprep.subr.mxu0 0.0
        %1589 = vmatpush2.msra.mxu0 0.0
        %1590 = vmatprep.subr.mxu0 0.0
        %1591 = vmatpush2.msra.mxu0 0.0
        %1592 = vmatprep.subr.mxu0 0.0
        %1593 = vmatpush2.msra.mxu0 0.0
        %1594 = vmatprep.subr.mxu0 0.0
        %1595 = vmatpush2.msra.mxu0 0.0
        %1596 = vmatprep.subr.mxu0 0.0
        %1597 = vmatpush2.msra.mxu0 0.0
        %1598 = vmatprep.subr.mxu0 0.0
        %1599 = vmatpush2.msra.mxu0 0.0
        %1600 = vmatprep.subr.mxu0 0.0
        %1601 = vmatpush2.msra.mxu0 0.0
        %1602 = vmatprep.subr.mxu0 0.0
        %1603 = vmatpush2.msra.mxu0 0.0
        %1604 = vmatprep.subr.mxu0 0.0
        %1605 = vmatpush2.msra.mxu0 0.0
        %1606 = vmatprep.subr.mxu0 0.0
        %1607 = vmatpush2.msra.mxu0 0.0
        %1608 = vmatprep.mubr.f32.mxu0 0.0
        %1609 = vmatmul.mubr.f32.gmra.mxu0 %v1539
        %v1610 = vpop.f32.mrf.mxu0
        %v1611 = vadd.f32 0.0, %v1610
        %v1612 = vpop.f32.mrf.mxu0
        %1613 = vmatprep.mubr.f32.mxu0 0.0
        %1614 = vmatmul.mubr.f32.gmra.mxu0 %v1542
        %v1615 = vpop.f32.mrf.mxu0
        %v1616 = vadd.f32 0.0, %v1615
        %v1617 = vpop.f32.mrf.mxu0
        %1618 = vdwg.mxu0
        %1621 = vrot.lane.b32.xlu0 %v1611, 96
        %v1622 = vpop.permute.xlu0 %1621
        %1623 = vrot.lane.b32.xlu0 %v1616, 96
        %v1624 = vpop.permute.xlu0 %1623
        %vm1627 = vcmask 1048320
        %1628 = vst.msk [vmem:[#allocation3] sm:$0xff] %vm1627, %v1622
        %1629 = vst.msk [vmem:[#allocation3 + $0x8] sm:$0xff] %vm1627, %v1624
        %v1630 = vld [vmem:[#allocation3] sm:$0xff]
        %v1631 = vld [vmem:[#allocation3 + $0x8] sm:$0xff]
        %v1632 = vld [vmem:[%s435] sm:$0xff]
        %v1633 = vld [vmem:[%s435 + $0x8] sm:$0xff]
        %v1634 = vld [vmem:[%s435 + $0x10] sm:$0xff]
        %v1635 = vld [vmem:[%s435 + $0x18] sm:$0xff]
        %v1636 = vld [vmem:[%s435 + $0x20] sm:$0xff]
        %v1637 = vld [vmem:[%s435 + $0x28] sm:$0xff]
        %v1638 = vld [vmem:[%s435 + $0x30] sm:$0xff]
        %v1639 = vld [vmem:[%s435 + $0x38] sm:$0xff]
        %v1640 = vld [vmem:[%s435 + $0x40] sm:$0xff]
        %v1641 = vld [vmem:[%s435 + $0x48] sm:$0xff]
        %v1642 = vld [vmem:[%s435 + $0x50] sm:$0xff]
        %v1643 = vld [vmem:[%s435 + $0x58] sm:$0xff]
        %v1644 = vld [vmem:[%s435 + $0x60] sm:$0xff]
        %v1645 = vld [vmem:[%s435 + $0x68] sm:$0xff]
        %v1646 = vld [vmem:[%s435 + $0x70] sm:$0xff]
        %v1647 = vld [vmem:[%s435 + $0x78] sm:$0xff]
        %1648 = vmatprep.subr.mxu0 0.0
        %1649 = vmatpush1.msra.mxu0 %v1647
        %1650 = vmatprep.subr.mxu0 0.0
        %1651 = vmatpush1.msra.mxu0 %v1646
        %1652 = vmatprep.subr.mxu0 0.0
        %1653 = vmatpush1.msra.mxu0 %v1645
        %1654 = vmatprep.subr.mxu0 0.0
        %1655 = vmatpush1.msra.mxu0 %v1644
        %1656 = vmatprep.subr.mxu0 0.0
        %1657 = vmatpush1.msra.mxu0 %v1643
        %1658 = vmatprep.subr.mxu0 0.0
        %1659 = vmatpush1.msra.mxu0 %v1642
        %1660 = vmatprep.subr.mxu0 0.0
        %1661 = vmatpush1.msra.mxu0 %v1641
        %1662 = vmatprep.subr.mxu0 0.0
        %1663 = vmatpush1.msra.mxu0 %v1640
        %1664 = vmatprep.subr.mxu0 0.0
        %1665 = vmatpush1.msra.mxu0 %v1639
        %1666 = vmatprep.subr.mxu0 0.0
        %1667 = vmatpush1.msra.mxu0 %v1638
        %1668 = vmatprep.subr.mxu0 0.0
        %1669 = vmatpush1.msra.mxu0 %v1637
        %1670 = vmatprep.subr.mxu0 0.0
        %1671 = vmatpush1.msra.mxu0 %v1636
        %1672 = vmatprep.subr.mxu0 0.0
        %1673 = vmatpush1.msra.mxu0 %v1635
        %1674 = vmatprep.subr.mxu0 0.0
        %1675 = vmatpush1.msra.mxu0 %v1634
        %1676 = vmatprep.subr.mxu0 0.0
        %1677 = vmatpush1.msra.mxu0 %v1633
        %1678 = vmatprep.subr.mxu0 0.0
        %1679 = vmatpush1.msra.mxu0 %v1632
        %1680 = vmatprep.subr.mxu0 0.0
        %1681 = vmatpush2.msra.mxu0 0.0
        %1682 = vmatprep.subr.mxu0 0.0
        %1683 = vmatpush2.msra.mxu0 0.0
        %1684 = vmatprep.subr.mxu0 0.0
        %1685 = vmatpush2.msra.mxu0 0.0
        %1686 = vmatprep.subr.mxu0 0.0
        %1687 = vmatpush2.msra.mxu0 0.0
        %1688 = vmatprep.subr.mxu0 0.0
        %1689 = vmatpush2.msra.mxu0 0.0
        %1690 = vmatprep.subr.mxu0 0.0
        %1691 = vmatpush2.msra.mxu0 0.0
        %1692 = vmatprep.subr.mxu0 0.0
        %1693 = vmatpush2.msra.mxu0 0.0
        %1694 = vmatprep.subr.mxu0 0.0
        %1695 = vmatpush2.msra.mxu0 0.0
        %1696 = vmatprep.subr.mxu0 0.0
        %1697 = vmatpush2.msra.mxu0 0.0
        %1698 = vmatprep.subr.mxu0 0.0
        %1699 = vmatpush2.msra.mxu0 0.0
        %1700 = vmatprep.subr.mxu0 0.0
        %1701 = vmatpush2.msra.mxu0 0.0
        %1702 = vmatprep.subr.mxu0 0.0
        %1703 = vmatpush2.msra.mxu0 0.0
        %1704 = vmatprep.subr.mxu0 0.0
        %1705 = vmatpush2.msra.mxu0 0.0
        %1706 = vmatprep.subr.mxu0 0.0
        %1707 = vmatpush2.msra.mxu0 0.0
        %1708 = vmatprep.subr.mxu0 0.0
        %1709 = vmatpush2.msra.mxu0 0.0
        %1710 = vmatprep.subr.mxu0 0.0
        %1711 = vmatpush2.msra.mxu0 0.0
        %1712 = vmatprep.mubr.f32.mxu0 0.0
        %1713 = vmatmul.mubr.f32.gmra.mxu0 %v1630
        %v1714 = vpop.f32.mrf.mxu0
        %v1715 = vadd.f32 0.0, %v1714
        %v1716 = vpop.f32.mrf.mxu0
        %1717 = vmatprep.mubr.f32.mxu0 0.0
        %1718 = vmatmul.mubr.f32.gmra.mxu0 %v1631
        %v1719 = vpop.f32.mrf.mxu0
        %v1720 = vadd.f32 0.0, %v1719
        %v1721 = vpop.f32.mrf.mxu0
        %1722 = vdwg.mxu0
        %v1723 = vadd.f32 %v522, %v1715
        %v1724 = vadd.f32 %v523, %v1720
        %v1725 = vmul.f32 %v1723, %v1723
        %v1726 = vmul.f32 %v1724, %v1724
        %1727 = vadd.xlane.f32.xlu0 %v1725
        %v1728 = vpop.xlane.xlu0 %1727
        %1729 = vadd.xlane.f32.xlu0 %v1726
        %v1730 = vpop.xlane.xlu0 %1729
        %v1731 = vmul.f32 %v1728, %v552
        %v1732 = vmul.f32 %v1730, %v552
        %v1733 = vadd.f32 %v1731, 1e-06
        %v1734 = vadd.f32 %v1732, 1e-06
        %v1735 = vrsqrt.pop %v1733
        %v1736 = vrsqrt.pop %v1734
        %v1737 = vmul.f32 %v1723, %v1735
        %v1738 = vmul.f32 %v1724, %v1736
        %v1739 = vlaneseq
        %v1740 = vshrl.u32 %v1739, 7
        %v1741 = vsub.s32 1, %v1740
        %v1742 = vrot.slane %v524, %v1741
        %v1743 = vmul.f32 %v1737, %v1742
        %v1744 = vmul.f32 %v1738, %v1742
        %v1745 = vld [vmem:[%s444] sm:$0xff]
        %v1746 = vld [vmem:[%s444 + $0x8] sm:$0xff]
        %v1747 = vld [vmem:[%s444 + $0x10] sm:$0xff]
        %v1748 = vld [vmem:[%s444 + $0x18] sm:$0xff]
        %v1749 = vld [vmem:[%s444 + $0x20] sm:$0xff]
        %v1750 = vld [vmem:[%s444 + $0x28] sm:$0xff]
        %v1751 = vld [vmem:[%s444 + $0x30] sm:$0xff]
        %v1752 = vld [vmem:[%s444 + $0x38] sm:$0xff]
        %v1753 = vld [vmem:[%s444 + $0x40] sm:$0xff]
        %v1754 = vld [vmem:[%s444 + $0x48] sm:$0xff]
        %v1755 = vld [vmem:[%s444 + $0x50] sm:$0xff]
        %v1756 = vld [vmem:[%s444 + $0x58] sm:$0xff]
        %v1757 = vld [vmem:[%s444 + $0x60] sm:$0xff]
        %v1758 = vld [vmem:[%s444 + $0x68] sm:$0xff]
        %v1759 = vld [vmem:[%s444 + $0x70] sm:$0xff]
        %v1760 = vld [vmem:[%s444 + $0x78] sm:$0xff]
        %v1761 = vld [vmem:[%s444 + $0x80] sm:$0xff]
        %v1762 = vld [vmem:[%s444 + $0x88] sm:$0xff]
        %v1763 = vld [vmem:[%s444 + $0x90] sm:$0xff]
        %v1764 = vld [vmem:[%s444 + $0x98] sm:$0xff]
        %v1765 = vld [vmem:[%s444 + $0xa0] sm:$0xff]
        %v1766 = vld [vmem:[%s444 + $0xa8] sm:$0xff]
        %v1767 = vld [vmem:[%s444 + $0xb0] sm:$0xff]
        %v1768 = vld [vmem:[%s444 + $0xb8] sm:$0xff]
        %v1769 = vld [vmem:[%s444 + $0xc0] sm:$0xff]
        %v1770 = vld [vmem:[%s444 + $0xc8] sm:$0xff]
        %v1771 = vld [vmem:[%s444 + $0xd0] sm:$0xff]
        %v1772 = vld [vmem:[%s444 + $0xd8] sm:$0xff]
        %v1773 = vld [vmem:[%s444 + $0xe0] sm:$0xff]
        %v1774 = vld [vmem:[%s444 + $0xe8] sm:$0xff]
        %v1775 = vld [vmem:[%s444 + $0xf0] sm:$0xff]
        %v1776 = vld [vmem:[%s444 + $0xf8] sm:$0xff]
        %v1777 = vld [vmem:[%s444 + $0x100] sm:$0xff]
        %v1778 = vld [vmem:[%s444 + $0x108] sm:$0xff]
        %v1779 = vld [vmem:[%s444 + $0x110] sm:$0xff]
        %v1780 = vld [vmem:[%s444 + $0x118] sm:$0xff]
        %v1781 = vld [vmem:[%s444 + $0x120] sm:$0xff]
        %v1782 = vld [vmem:[%s444 + $0x128] sm:$0xff]
        %v1783 = vld [vmem:[%s444 + $0x130] sm:$0xff]
        %v1784 = vld [vmem:[%s444 + $0x138] sm:$0xff]
        %v1785 = vld [vmem:[%s444 + $0x140] sm:$0xff]
        %v1786 = vld [vmem:[%s444 + $0x148] sm:$0xff]
        %v1787 = vld [vmem:[%s444 + $0x150] sm:$0xff]
        %v1788 = vld [vmem:[%s444 + $0x158] sm:$0xff]
        %v1789 = vld [vmem:[%s444 + $0x160] sm:$0xff]
        %v1790 = vld [vmem:[%s444 + $0x168] sm:$0xff]
        %v1791 = vld [vmem:[%s444 + $0x170] sm:$0xff]
        %v1792 = vld [vmem:[%s444 + $0x178] sm:$0xff]
        %v1793 = vld [vmem:[%s444 + $0x180] sm:$0xff]
        %v1794 = vld [vmem:[%s444 + $0x188] sm:$0xff]
        %v1795 = vld [vmem:[%s444 + $0x190] sm:$0xff]
        %v1796 = vld [vmem:[%s444 + $0x198] sm:$0xff]
        %v1797 = vld [vmem:[%s444 + $0x1a0] sm:$0xff]
        %v1798 = vld [vmem:[%s444 + $0x1a8] sm:$0xff]
        %v1799 = vld [vmem:[%s444 + $0x1b0] sm:$0xff]
        %v1800 = vld [vmem:[%s444 + $0x1b8] sm:$0xff]
        %v1801 = vld [vmem:[%s444 + $0x1c0] sm:$0xff]
        %v1802 = vld [vmem:[%s444 + $0x1c8] sm:$0xff]
        %v1803 = vld [vmem:[%s444 + $0x1d0] sm:$0xff]
        %v1804 = vld [vmem:[%s444 + $0x1d8] sm:$0xff]
        %v1805 = vld [vmem:[%s444 + $0x1e0] sm:$0xff]
        %v1806 = vld [vmem:[%s444 + $0x1e8] sm:$0xff]
        %v1807 = vld [vmem:[%s444 + $0x1f0] sm:$0xff]
        %v1808 = vld [vmem:[%s444 + $0x1f8] sm:$0xff]
        %1809 = vmatprep.subr.mxu0 %v1806
        %1810 = vmatpush1.msra.mxu0 %v1805
        %1811 = vmatprep.subr.mxu0 %v1802
        %1812 = vmatpush1.msra.mxu0 %v1801
        %1813 = vmatprep.subr.mxu0 %v1798
        %1814 = vmatpush1.msra.mxu0 %v1797
        %1815 = vmatprep.subr.mxu0 %v1794
        %1816 = vmatpush1.msra.mxu0 %v1793
        %1817 = vmatprep.subr.mxu0 %v1790
        %1818 = vmatpush1.msra.mxu0 %v1789
        %1819 = vmatprep.subr.mxu0 %v1786
        %1820 = vmatpush1.msra.mxu0 %v1785
        %1821 = vmatprep.subr.mxu0 %v1782
        %1822 = vmatpush1.msra.mxu0 %v1781
        %1823 = vmatprep.subr.mxu0 %v1778
        %1824 = vmatpush1.msra.mxu0 %v1777
        %1825 = vmatprep.subr.mxu0 %v1774
        %1826 = vmatpush1.msra.mxu0 %v1773
        %1827 = vmatprep.subr.mxu0 %v1770
        %1828 = vmatpush1.msra.mxu0 %v1769
        %1829 = vmatprep.subr.mxu0 %v1766
        %1830 = vmatpush1.msra.mxu0 %v1765
        %1831 = vmatprep.subr.mxu0 %v1762
        %1832 = vmatpush1.msra.mxu0 %v1761
        %1833 = vmatprep.subr.mxu0 %v1758
        %1834 = vmatpush1.msra.mxu0 %v1757
        %1835 = vmatprep.subr.mxu0 %v1754
        %1836 = vmatpush1.msra.mxu0 %v1753
        %1837 = vmatprep.subr.mxu0 %v1750
        %1838 = vmatpush1.msra.mxu0 %v1749
        %1839 = vmatprep.subr.mxu0 %v1746
        %1840 = vmatpush1.msra.mxu0 %v1745
        %1841 = vmatprep.subr.mxu0 0.0
        %1842 = vmatpush2.msra.mxu0 0.0
        %1843 = vmatprep.subr.mxu0 0.0
        %1844 = vmatpush2.msra.mxu0 0.0
        %1845 = vmatprep.subr.mxu0 0.0
        %1846 = vmatpush2.msra.mxu0 0.0
        %1847 = vmatprep.subr.mxu0 0.0
        %1848 = vmatpush2.msra.mxu0 0.0
        %1849 = vmatprep.subr.mxu0 0.0
        %1850 = vmatpush2.msra.mxu0 0.0
        %1851 = vmatprep.subr.mxu0 0.0
        %1852 = vmatpush2.msra.mxu0 0.0
        %1853 = vmatprep.subr.mxu0 0.0
        %1854 = vmatpush2.msra.mxu0 0.0
        %1855 = vmatprep.subr.mxu0 0.0
        %1856 = vmatpush2.msra.mxu0 0.0
        %1857 = vmatprep.subr.mxu0 0.0
        %1858 = vmatpush2.msra.mxu0 0.0
        %1859 = vmatprep.subr.mxu0 0.0
        %1860 = vmatpush2.msra.mxu0 0.0
        %1861 = vmatprep.subr.mxu0 0.0
        %1862 = vmatpush2.msra.mxu0 0.0
        %1863 = vmatprep.subr.mxu0 0.0
        %1864 = vmatpush2.msra.mxu0 0.0
        %1865 = vmatprep.subr.mxu0 0.0
        %1866 = vmatpush2.msra.mxu0 0.0
        %1867 = vmatprep.subr.mxu0 0.0
        %1868 = vmatpush2.msra.mxu0 0.0
        %1869 = vmatprep.subr.mxu0 0.0
        %1870 = vmatpush2.msra.mxu0 0.0
        %1871 = vmatprep.subr.mxu0 0.0
        %1872 = vmatpush2.msra.mxu0 0.0
        %1873 = vmatprep.mubr.f32.mxu0 0.0
        %1874 = vmatmul.mubr.f32.gmra.mxu0 %v1743
        %v1875 = vpop.f32.mrf.mxu0
        %v1876 = vadd.f32 0.0, %v1875
        %v1877 = vpop.f32.mrf.mxu0
        %v1878 = vadd.f32 0.0, %v1877
        %1879 = vmatprep.mubr.f32.mxu0 0.0
        %1880 = vmatmul.mubr.f32.gmra.mxu0 %v1744
        %v1881 = vpop.f32.mrf.mxu0
        %v1882 = vadd.f32 0.0, %v1881
        %v1883 = vpop.f32.mrf.mxu0
        %v1884 = vadd.f32 0.0, %v1883
        %1885 = vdwg.mxu0
        %1886 = vmatprep.subr.mxu0 %v1808
        %1887 = vmatpush1.msra.mxu0 %v1807
        %1888 = vmatprep.subr.mxu0 %v1804
        %1889 = vmatpush1.msra.mxu0 %v1803
        %1890 = vmatprep.subr.mxu0 %v1800
        %1891 = vmatpush1.msra.mxu0 %v1799
        %1892 = vmatprep.subr.mxu0 %v1796
        %1893 = vmatpush1.msra.mxu0 %v1795
        %1894 = vmatprep.subr.mxu0 %v1792
        %1895 = vmatpush1.msra.mxu0 %v1791
        %1896 = vmatprep.subr.mxu0 %v1788
        %1897 = vmatpush1.msra.mxu0 %v1787
        %1898 = vmatprep.subr.mxu0 %v1784
        %1899 = vmatpush1.msra.mxu0 %v1783
        %1900 = vmatprep.subr.mxu0 %v1780
        %1901 = vmatpush1.msra.mxu0 %v1779
        %1902 = vmatprep.subr.mxu0 %v1776
        %1903 = vmatpush1.msra.mxu0 %v1775
        %1904 = vmatprep.subr.mxu0 %v1772
        %1905 = vmatpush1.msra.mxu0 %v1771
        %1906 = vmatprep.subr.mxu0 %v1768
        %1907 = vmatpush1.msra.mxu0 %v1767
        %1908 = vmatprep.subr.mxu0 %v1764
        %1909 = vmatpush1.msra.mxu0 %v1763
        %1910 = vmatprep.subr.mxu0 %v1760
        %1911 = vmatpush1.msra.mxu0 %v1759
        %1912 = vmatprep.subr.mxu0 %v1756
        %1913 = vmatpush1.msra.mxu0 %v1755
        %1914 = vmatprep.subr.mxu0 %v1752
        %1915 = vmatpush1.msra.mxu0 %v1751
        %1916 = vmatprep.subr.mxu0 %v1748
        %1917 = vmatpush1.msra.mxu0 %v1747
        %1918 = vmatprep.subr.mxu0 0.0
        %1919 = vmatpush2.msra.mxu0 0.0
        %1920 = vmatprep.subr.mxu0 0.0
        %1921 = vmatpush2.msra.mxu0 0.0
        %1922 = vmatprep.subr.mxu0 0.0
        %1923 = vmatpush2.msra.mxu0 0.0
        %1924 = vmatprep.subr.mxu0 0.0
        %1925 = vmatpush2.msra.mxu0 0.0
        %1926 = vmatprep.subr.mxu0 0.0
        %1927 = vmatpush2.msra.mxu0 0.0
        %1928 = vmatprep.subr.mxu0 0.0
        %1929 = vmatpush2.msra.mxu0 0.0
        %1930 = vmatprep.subr.mxu0 0.0
        %1931 = vmatpush2.msra.mxu0 0.0
        %1932 = vmatprep.subr.mxu0 0.0
        %1933 = vmatpush2.msra.mxu0 0.0
        %1934 = vmatprep.subr.mxu0 0.0
        %1935 = vmatpush2.msra.mxu0 0.0
        %1936 = vmatprep.subr.mxu0 0.0
        %1937 = vmatpush2.msra.mxu0 0.0
        %1938 = vmatprep.subr.mxu0 0.0
        %1939 = vmatpush2.msra.mxu0 0.0
        %1940 = vmatprep.subr.mxu0 0.0
        %1941 = vmatpush2.msra.mxu0 0.0
        %1942 = vmatprep.subr.mxu0 0.0
        %1943 = vmatpush2.msra.mxu0 0.0
        %1944 = vmatprep.subr.mxu0 0.0
        %1945 = vmatpush2.msra.mxu0 0.0
        %1946 = vmatprep.subr.mxu0 0.0
        %1947 = vmatpush2.msra.mxu0 0.0
        %1948 = vmatprep.subr.mxu0 0.0
        %1949 = vmatpush2.msra.mxu0 0.0
        %1950 = vmatprep.mubr.f32.mxu0 0.0
        %1951 = vmatmul.mubr.f32.gmra.mxu0 %v1743
        %v1952 = vpop.f32.mrf.mxu0
        %v1953 = vadd.f32 0.0, %v1952
        %v1954 = vpop.f32.mrf.mxu0
        %v1955 = vadd.f32 0.0, %v1954
        %1956 = vmatprep.mubr.f32.mxu0 0.0
        %1957 = vmatmul.mubr.f32.gmra.mxu0 %v1744
        %v1958 = vpop.f32.mrf.mxu0
        %v1959 = vadd.f32 0.0, %v1958
        %v1960 = vpop.f32.mrf.mxu0
        %v1961 = vadd.f32 0.0, %v1960
        %1962 = vdwg.mxu0
        %v1963 = vmul.f32 %v1876, 0.5
        %v1964 = vmul.f32 %v1878, 0.5
        %v1965 = vmul.f32 %v1882, 0.5
        %v1966 = vmul.f32 %v1884, 0.5
        %v1967 = vmul.f32 %v1876, 0.044715
        %v1968 = vmul.f32 %v1878, 0.044715
        %v1969 = vmul.f32 %v1882, 0.044715
        %v1970 = vmul.f32 %v1884, 0.044715
        %v1971 = vmul.f32 %v1967, %v1876
        %v1972 = vmul.f32 %v1968, %v1878
        %v1973 = vmul.f32 %v1969, %v1882
        %v1974 = vmul.f32 %v1970, %v1884
        %v1975 = vmul.f32 %v1971, %v1876
        %v1976 = vmul.f32 %v1972, %v1878
        %v1977 = vmul.f32 %v1973, %v1882
        %v1978 = vmul.f32 %v1974, %v1884
        %v1979 = vadd.f32 %v1876, %v1975
        %v1980 = vadd.f32 %v1878, %v1976
        %v1981 = vadd.f32 %v1882, %v1977
        %v1982 = vadd.f32 %v1884, %v1978
        %v1983 = vmul.f32 %v1979, 0.7978846
        %v1984 = vmul.f32 %v1980, 0.7978846
        %v1985 = vmul.f32 %v1981, 0.7978846
        %v1986 = vmul.f32 %v1982, 0.7978846
        %v1987 = vtanh.pop %v1983
        %v1988 = vtanh.pop %v1984
        %v1989 = vtanh.pop %v1985
        %v1990 = vtanh.pop %v1986
        %v1991 = vadd.f32 %v1987, 1.0
        %v1992 = vadd.f32 %v1988, 1.0
        %v1993 = vadd.f32 %v1989, 1.0
        %v1994 = vadd.f32 %v1990, 1.0
        %v1995 = vmul.f32 %v1963, %v1991
        %v1996 = vmul.f32 %v1964, %v1992
        %v1997 = vmul.f32 %v1965, %v1993
        %v1998 = vmul.f32 %v1966, %v1994
        %v1999 = vmul.f32 %v1995, %v1953
        %v2000 = vmul.f32 %v1996, %v1955
        %v2001 = vmul.f32 %v1997, %v1959
        %v2002 = vmul.f32 %v1998, %v1961
        %v2003 = vld [vmem:[%s453] sm:$0xff]
        %v2004 = vld [vmem:[%s453 + $0x8] sm:$0xff]
        %v2005 = vld [vmem:[%s453 + $0x10] sm:$0xff]
        %v2006 = vld [vmem:[%s453 + $0x18] sm:$0xff]
        %v2007 = vld [vmem:[%s453 + $0x20] sm:$0xff]
        %v2008 = vld [vmem:[%s453 + $0x28] sm:$0xff]
        %v2009 = vld [vmem:[%s453 + $0x30] sm:$0xff]
        %v2010 = vld [vmem:[%s453 + $0x38] sm:$0xff]
        %v2011 = vld [vmem:[%s453 + $0x40] sm:$0xff]
        %v2012 = vld [vmem:[%s453 + $0x48] sm:$0xff]
        %v2013 = vld [vmem:[%s453 + $0x50] sm:$0xff]
        %v2014 = vld [vmem:[%s453 + $0x58] sm:$0xff]
        %v2015 = vld [vmem:[%s453 + $0x60] sm:$0xff]
        %v2016 = vld [vmem:[%s453 + $0x68] sm:$0xff]
        %v2017 = vld [vmem:[%s453 + $0x70] sm:$0xff]
        %v2018 = vld [vmem:[%s453 + $0x78] sm:$0xff]
        %v2019 = vld [vmem:[%s453 + $0x80] sm:$0xff]
        %v2020 = vld [vmem:[%s453 + $0x88] sm:$0xff]
        %v2021 = vld [vmem:[%s453 + $0x90] sm:$0xff]
        %v2022 = vld [vmem:[%s453 + $0x98] sm:$0xff]
        %v2023 = vld [vmem:[%s453 + $0xa0] sm:$0xff]
        %v2024 = vld [vmem:[%s453 + $0xa8] sm:$0xff]
        %v2025 = vld [vmem:[%s453 + $0xb0] sm:$0xff]
        %v2026 = vld [vmem:[%s453 + $0xb8] sm:$0xff]
        %v2027 = vld [vmem:[%s453 + $0xc0] sm:$0xff]
        %v2028 = vld [vmem:[%s453 + $0xc8] sm:$0xff]
        %v2029 = vld [vmem:[%s453 + $0xd0] sm:$0xff]
        %v2030 = vld [vmem:[%s453 + $0xd8] sm:$0xff]
        %v2031 = vld [vmem:[%s453 + $0xe0] sm:$0xff]
        %v2032 = vld [vmem:[%s453 + $0xe8] sm:$0xff]
        %v2033 = vld [vmem:[%s453 + $0xf0] sm:$0xff]
        %v2034 = vld [vmem:[%s453 + $0xf8] sm:$0xff]
        %2035 = vmatprep.subr.mxu0 0.0
        %2036 = vmatpush1.msra.mxu0 %v2018
        %2037 = vmatprep.subr.mxu0 0.0
        %2038 = vmatpush1.msra.mxu0 %v2017
        %2039 = vmatprep.subr.mxu0 0.0
        %2040 = vmatpush1.msra.mxu0 %v2016
        %2041 = vmatprep.subr.mxu0 0.0
        %2042 = vmatpush1.msra.mxu0 %v2015
        %2043 = vmatprep.subr.mxu0 0.0
        %2044 = vmatpush1.msra.mxu0 %v2014
        %2045 = vmatprep.subr.mxu0 0.0
        %2046 = vmatpush1.msra.mxu0 %v2013
        %2047 = vmatprep.subr.mxu0 0.0
        %2048 = vmatpush1.msra.mxu0 %v2012
        %2049 = vmatprep.subr.mxu0 0.0
        %2050 = vmatpush1.msra.mxu0 %v2011
        %2051 = vmatprep.subr.mxu0 0.0
        %2052 = vmatpush1.msra.mxu0 %v2010
        %2053 = vmatprep.subr.mxu0 0.0
        %2054 = vmatpush1.msra.mxu0 %v2009
        %2055 = vmatprep.subr.mxu0 0.0
        %2056 = vmatpush1.msra.mxu0 %v2008
        %2057 = vmatprep.subr.mxu0 0.0
        %2058 = vmatpush1.msra.mxu0 %v2007
        %2059 = vmatprep.subr.mxu0 0.0
        %2060 = vmatpush1.msra.mxu0 %v2006
        %2061 = vmatprep.subr.mxu0 0.0
        %2062 = vmatpush1.msra.mxu0 %v2005
        %2063 = vmatprep.subr.mxu0 0.0
        %2064 = vmatpush1.msra.mxu0 %v2004
        %2065 = vmatprep.subr.mxu0 0.0
        %2066 = vmatpush1.msra.mxu0 %v2003
        %2067 = vmatprep.subr.mxu0 0.0
        %2068 = vmatpush2.msra.mxu0 %v2034
        %2069 = vmatprep.subr.mxu0 0.0
        %2070 = vmatpush2.msra.mxu0 %v2033
        %2071 = vmatprep.subr.mxu0 0.0
        %2072 = vmatpush2.msra.mxu0 %v2032
        %2073 = vmatprep.subr.mxu0 0.0
        %2074 = vmatpush2.msra.mxu0 %v2031
        %2075 = vmatprep.subr.mxu0 0.0
        %2076 = vmatpush2.msra.mxu0 %v2030
        %2077 = vmatprep.subr.mxu0 0.0
        %2078 = vmatpush2.msra.mxu0 %v2029
        %2079 = vmatprep.subr.mxu0 0.0
        %2080 = vmatpush2.msra.mxu0 %v2028
        %2081 = vmatprep.subr.mxu0 0.0
        %2082 = vmatpush2.msra.mxu0 %v2027
        %2083 = vmatprep.subr.mxu0 0.0
        %2084 = vmatpush2.msra.mxu0 %v2026
        %2085 = vmatprep.subr.mxu0 0.0
        %2086 = vmatpush2.msra.mxu0 %v2025
        %2087 = vmatprep.subr.mxu0 0.0
        %2088 = vmatpush2.msra.mxu0 %v2024
        %2089 = vmatprep.subr.mxu0 0.0
        %2090 = vmatpush2.msra.mxu0 %v2023
        %2091 = vmatprep.subr.mxu0 0.0
        %2092 = vmatpush2.msra.mxu0 %v2022
        %2093 = vmatprep.subr.mxu0 0.0
        %2094 = vmatpush2.msra.mxu0 %v2021
        %2095 = vmatprep.subr.mxu0 0.0
        %2096 = vmatpush2.msra.mxu0 %v2020
        %2097 = vmatprep.subr.mxu0 0.0
        %2098 = vmatpush2.msra.mxu0 %v2019
        %2099 = vmatprep.mubr.f32.mxu0 %v2000
        %2100 = vmatmul.mubr.f32.gmra.mxu0 %v1999
        %v2101 = vpop.f32.mrf.mxu0
        %v2102 = vadd.f32 0.0, %v2101
        %v2103 = vpop.f32.mrf.mxu0
        %2104 = vmatprep.mubr.f32.mxu0 %v2002
        %2105 = vmatmul.mubr.f32.gmra.mxu0 %v2001
        %v2106 = vpop.f32.mrf.mxu0
        %v2107 = vadd.f32 0.0, %v2106
        %v2108 = vpop.f32.mrf.mxu0
        %2109 = vdwg.mxu0
        %v2110 = vadd.f32 %v1723, %v2102
        %v2111 = vadd.f32 %v1724, %v2107
        %2112 = vst [vmem:[#allocation2] sm:$0xff] %v2110
        %2113 = vst [vmem:[#allocation2 + $0x8] sm:$0xff] %v2111
        %p2114 = scmp.eq.s32.totalorder %s29, 2
        // Predicated region
        $region89: #{tpu_custom_call.1} parent=55 // pred_check
          %p2115 = pneg %p2114
        $region90: #{tpu_custom_call.1} parent=55 // pred_check_branch
          %2117 = sbr.rel (%p2115) target = $region92
        $region91: #{tpu_custom_call.1} parent=55 // pred_region
          %v2118 = vld [vmem:[%s8] sm:$0x1]
          %v2119 = vmul.f32 %v2110, %v2110
          %v2120 = vmul.f32 %v2111, %v2111
          %2121 = vadd.xlane.f32.xlu0 %v2119
          %v2122 = vpop.xlane.xlu0 %2121
          %2123 = vadd.xlane.f32.xlu0 %v2120
          %v2124 = vpop.xlane.xlu0 %2123
          %v2125 = vmul.f32 %v2122, %v552
          %v2126 = vmul.f32 %v2124, %v552
          %v2127 = vadd.f32 %v2125, 1e-06
          %v2128 = vadd.f32 %v2126, 1e-06
          %v2129 = vrsqrt.pop %v2127
          %v2130 = vrsqrt.pop %v2128
          %v2131 = vmul.f32 %v2110, %v2129
          %v2132 = vmul.f32 %v2111, %v2130
          %v2134 = vlaneseq
          %v2135 = vshrl.u32 %v2134, 7
          %v2136 = vsub.s32 0, %v2135
          %v2137 = vrot.slane %v2118, %v2136
          %v2139 = vmul.f32 %v2131, %v2137
          %v2140 = vmul.f32 %v2132, %v2137
          %2141 = vst [vmem:[#allocation16] sm:$0xff] %v2139
          %2142 = vst [vmem:[#allocation16 + $0x8] sm:$0xff] %v2140
        $region92: #{tpu_custom_call.1} parent=55 // pred_fallthru
          _
        // Predicated region
        $region93: #{tpu_custom_call.1} parent=55 // pred_check
          %p2143 = pneg %p256
        $region94: #{tpu_custom_call.1} parent=55 // pred_check_branch
          %2145 = sbr.rel (%p2143) target = $region96
        $region95: #{tpu_custom_call.1} parent=55 // pred_region
          %s2147 = ssub.s32 256, 256
          %2148 = vsyncadd [#allocation6], %s2147
          %s2149 = sshll.u32 [#allocation16], 4
          %s2150 = int_to_ptr.vmem [resolvable:$true] %s2149
          %2155 = dma.vmem_to_hbm [thread:$0]  %s2150, 256, %s9, [#allocation6], 128, 128, 8
        $region96: #{tpu_custom_call.1} parent=55 // pred_fallthru
          _
        // Predicated region
        $region97: #{tpu_custom_call.1} parent=55 // pred_check
          %p2156 = pneg %p256
        $region98: #{tpu_custom_call.1} parent=55 // pred_check_branch
          %2158 = sbr.rel (%p2156) target = $region100
        $region99: #{tpu_custom_call.1} parent=55 // pred_region
          %2159 = dma.done [#allocation6], 256
        $region100: #{tpu_custom_call.1} parent=55 // pred_fallthru
          _
      $region56: #{tpu_custom_call.1} parent=5 // pred_fallthru
        _
      %p2160 = scmp.le.s32.totalorder 2, %s24
      // Predicated region
      $region101: #{tpu_custom_call.1} parent=5 // pred_check
        %p2161 = pneg %p2160
      $region102: #{tpu_custom_call.1} parent=5 // pred_check_branch
        %2163 = sbr.rel (%p2161) target = $region104
      $region103: #{tpu_custom_call.1} parent=5 // pred_region
        %s2164 = ssub.s32 %s24, 2
      $region104: #{tpu_custom_call.1} parent=5 // pred_fallthru
        _
    $region6: #{tpu_custom_call.1} parent=1 // loop_footer
      %s28 = sadd.s32 1, %s24
    $region7: #{tpu_custom_call.1} parent=1 // loop_footer_branch
      %23 = sbr.rel target = $region3
    $region8: #{tpu_custom_call.1} parent=1 // loop_exit
      _
    %2165 = vsyncpa [#allocation5], 1
    %s2166 = scalar_lea.sflag [#allocation5], 1
    %2167 = vsyncpa %s2166, 1
    %2168 = vsyncpa [#allocation8], 1
    %s2169 = scalar_lea.sflag [#allocation8], 1
    %2170 = vsyncpa %s2169, 1
    %2171 = vsyncpa [#allocation11], 1
    %s2172 = scalar_lea.sflag [#allocation11], 1
    %2173 = vsyncpa %s2172, 1
    %2174 = vsyncpa [#allocation14], 1
    %2175 = vsyncpa [#allocation6], 1
    %s2176 = scalar_lea.sflag [#allocation6], 1
    %2177 = vsyncpa %s2176, 1

</llo_original>
